<compile_context>
chip_gen: v6e
topology: v6e:2x2x1
jax: 0.10.0
libtpu: 0.0.40
codegen_flags: <defaults>
</compile_context>

<pallas_src>
import functools

import numpy as np
import jax
import jax.numpy as jnp
from jax.experimental import pallas as pl
from jax.experimental.pallas import tpu as pltpu


def _seft_kernel(fea_ref, times_ref, static_ref, inv_ts_ref,
                 w_time_ref, w_sensor_ref, w_valw_ref, w_valb_ref, b_lin_ref,
                 w_emb_ref, b_emb_ref,
                 w_m1h_ref, w_m1e_ref, b_m1_ref, w_m2_ref, b_m2_ref,
                 out_ref):
    f32 = jnp.float32
    dot = lambda a, b: jnp.dot(a, b, preferred_element_type=f32)

    # fea block: (BB, V, T) with T on the lane axis (lane-dense elementwise work).
    fea = fea_ref[...]
    mask = (fea != 0.0).astype(f32)            # torch.nonzero() semantics: 0 == missing

    cc = jnp.sum(mask, axis=2)                                 # (BB, V) per-sensor counts
    rc = jnp.sum(mask, axis=1)                                 # (BB, T) obs per time step
    count = jnp.sum(cc, axis=1, keepdims=True)                 # (BB, 1) total observations
    val_sum = jnp.sum(jnp.sum(fea, axis=2), axis=1, keepdims=True)     # (BB, 1)

    # Time positional encoding, lane-dense: timescale k on sublanes (8), T on lanes.
    scaled = times_ref[...][:, None, :] * inv_ts_ref[...]      # (BB, 8, T)
    rc3 = rc[:, None, :]                                       # (BB, 1, T)
    s_sin = jnp.sum(rc3 * jnp.sin(scaled), axis=2)             # (BB, 8)
    s_cos = jnp.sum(rc3 * jnp.cos(scaled), axis=2)             # (BB, 8)
    s_time = jnp.concatenate([s_sin, s_cos], axis=1)           # (BB, 16)

    # lin_map with the [f_prime, f_prime] duplication, the /count mean, the value
    # Linear(1,16) and the sensor-PE table all folded into the weights (wrapper-side).
    h = (dot(s_time, w_time_ref[...])                          # time-PE contribution
         + dot(cc, w_sensor_ref[...])                          # sensor-PE contribution
         + val_sum * w_valw_ref[...]                           # sum(value) * w_val rows
         + count * w_valb_ref[...])                            # count * b_val rows
    inv = jnp.where(count > 0.0, 1.0 / jnp.maximum(count, 1.0), 0.0)
    h = h * inv + b_lin_ref[...]                               # (BB, 128); empty series -> bias

    # Static-feature embedding.
    e = dot(static_ref[...], w_emb_ref[...]) + b_emb_ref[...]  # (BB, 16)

    # MLP head; cat([h, e]) @ W1 split into two matmuls (no in-kernel concat).
    z = dot(h, w_m1h_ref[...]) + dot(e, w_m1e_ref[...]) + b_m1_ref[...]
    z = jnp.maximum(z, 0.0)
    out_ref[...] = (dot(z, w_m2_ref[...]) + b_m2_ref[...]).astype(out_ref.dtype)


def _pick_batch_block(B):
    """Largest 8-aligned batch block dividing B (block must be 8-divisible or == B)."""
    for bb in (32, 16, 8):
        if B % bb == 0:
            return bb
    return B


@functools.partial(jax.jit, static_argnames=("max_len",))
def seft_forward(src, static, times, lengths, params, max_len=500):
    """Pallas equivalent of SEFT.forward(src, static, times, lengths).

    src:    (T, B, 2*d_inp)   only the first d_inp features (values) are used
    static: (B, d_static)
    times:  (T, B)
    lengths: unused by the PyTorch forward (kept for API parity).
    """
    del lengths
    (w_val, b_val, w_lin, b_lin, w_emb, b_emb, w_m1, b_m1, w_m2, b_m2) = params
    T, B, F = src.shape
    V = F // 2
    d_static = w_emb.shape[0]
    d_model = w_lin.shape[1]          # 128
    d_fi = w_m1.shape[1]              # 144
    n_classes = w_m2.shape[1]
    f32 = jnp.float32

    # ---------- one-time layout plumbing (wrapper side) ----------
    fea = jnp.transpose(src[:, :, :V], (1, 2, 0)).astype(f32)      # (B, V, T), lane = T
    times_bt = jnp.transpose(times, (1, 0)).astype(f32)            # (B, T),    lane = T
    static_f = static.astype(f32)

    # PositionalEncodingTF timescales: max_len ** linspace(0, 1, d_pe//2), d_pe = 16.
    ts = max_len ** np.linspace(0.0, 1.0, 8)
    inv_ts_np = (1.0 / ts).astype(np.float32)                      # (8,)
    inv_ts = jnp.asarray(inv_ts_np).reshape(1, 8, 1)

    # ---------- fold duplication / mean / concats / PE tables through lin_map ----------
    w_lin = w_lin.astype(f32)
    w_fold = w_lin[:48, :] + w_lin[48:96, :]                       # (48, 128): [f',f'] dup
    w_time = w_fold[0:16, :]                                       # (16, 128) time-PE rows
    w_valw = w_val.astype(f32) @ w_fold[16:32, :]                  # (1, 128)  value weight
    w_valb = b_val.astype(f32) @ w_fold[16:32, :]                  # (1, 128)  value bias
    vidx = jnp.arange(V, dtype=f32)[:, None] * jnp.asarray(inv_ts_np)[None, :]   # (V, 8)
    pe_s = jnp.concatenate([jnp.sin(vidx), jnp.cos(vidx)], axis=1)                # (V, 16)
    w_sensor = pe_s @ w_fold[32:48, :]                             # (V, 128) sensor-PE folded

    w_m1h = w_m1[:d_model, :].astype(f32)                          # (128, 144)
    w_m1e = w_m1[d_model:, :].astype(f32)                          # (16, 144)

    inputs = (fea, times_bt, static_f, inv_ts,
              w_time, w_sensor, w_valw, w_valb, b_lin.astype(f32),
              w_emb.astype(f32), b_emb.astype(f32),
              w_m1h, w_m1e, b_m1.astype(f32), w_m2.astype(f32), b_m2.astype(f32))

    BB = _pick_batch_block(B)
    nb = B // BB

    def const(*shape):
        return pl.BlockSpec(shape, lambda i: (0,) * len(shape))

    in_specs = [
        pl.BlockSpec((BB, V, T), lambda i: (i, 0, 0)),      # fea
        pl.BlockSpec((BB, T), lambda i: (i, 0)),            # times
        pl.BlockSpec((BB, d_static), lambda i: (i, 0)),     # static
        const(1, 8, 1),                                     # inv timescales
        const(16, d_model),                                 # w_time
        const(V, d_model),                                  # w_sensor
        const(1, d_model),                                  # w_valw
        const(1, d_model),                                  # w_valb
        const(1, d_model),                                  # b_lin
        const(d_static, 16),                                # w_emb
        const(1, 16),                                       # b_emb
        const(d_model, d_fi),                               # w_m1 (hidden rows)
        const(16, d_fi),                                    # w_m1 (static-emb rows)
        const(1, d_fi),                                     # b_m1
        const(d_fi, n_classes),                             # w_m2
        const(1, n_classes),                                # b_m2
    ]
    out_spec = pl.BlockSpec((BB, n_classes), lambda i: (i, 0))

    flops = int(2 * B * (16 * d_model + V * d_model + d_static * 16
                         + d_model * d_fi + 16 * d_fi + d_fi * n_classes)
                + 6 * B * V * T + 4 * B * 8 * T)
    transcendentals = int(2 * B * 8 * T)
    bytes_accessed = int(sum(int(np.prod(x.shape)) * 4 for x in inputs)
                         + B * n_classes * 4)

    return pl.pallas_call(
        _seft_kernel,
        out_shape=jax.ShapeDtypeStruct((B, n_classes), jnp.float32),
        grid_spec=pltpu.PrefetchScalarGridSpec(
            num_scalar_prefetch=0,
            grid=(nb,),
            in_specs=in_specs,
            out_specs=out_spec,
        ),
        compiler_params=pltpu.CompilerParams(
            dimension_semantics=("parallel",),          # batch blocks -> both TCs on v7x
            vmem_limit_bytes=32 * 1024 * 1024,          # explicit; per-block set is tiny
        ),
        cost_estimate=pl.CostEstimate(flops=flops,
                                      transcendentals=transcendentals,
                                      bytes_accessed=bytes_accessed),
    )(*inputs)


def init_seft_params(key, d_static, n_classes, scale=0.1):
    """Weights stored (in_features, out_features); biases (1, out_features)."""
    ks = jax.random.split(key, 10)
    w = lambda k, shape: scale * jax.random.normal(k, shape, jnp.float32)
    return (w(ks[0], (1, 16)), w(ks[1], (1, 16)),               # linear_value
            w(ks[2], (96, 128)), w(ks[3], (1, 128)),            # lin_map
            w(ks[4], (d_static, 16)), w(ks[5], (1, 16)),        # emb
            w(ks[6], (144, 144)), w(ks[7], (1, 144)),           # mlp[0]
            w(ks[8], (144, n_classes)), w(ks[9], (1, n_classes)))  # mlp[2]


def seft_reference(src, static, times, params, max_len=500):
    """NumPy reference mirroring the PyTorch per-batch nonzero() loop."""
    (w_val, b_val, w_lin, b_lin, w_emb, b_emb, w_m1, b_m1, w_m2, b_m2) = \
        [np.asarray(p) for p in params]
    src = np.asarray(src); static = np.asarray(static); times = np.asarray(times)
    T, B, F = src.shape
    V = F // 2
    ts = (max_len ** np.linspace(0.0, 1.0, 8)).astype(np.float32)
    fea = np.transpose(src, (1, 0, 2))[:, :, :V]
    out96 = np.zeros((B, 96), np.float32)
    for i in range(B):
        nz = np.argwhere(fea[i] != 0)
        if nz.shape[0] == 0:
            continue
        t_idx, v_idx = nz[:, 0], nz[:, 1]
        values = fea[i][t_idx, v_idx].astype(np.float32)
        tp = times[:, i][t_idx].astype(np.float32)
        pe_t = np.concatenate([np.sin(tp[:, None] / ts), np.cos(tp[:, None] / ts)], 1)
        vv = v_idx.astype(np.float32)
        pe_s = np.concatenate([np.sin(vv[:, None] / ts), np.cos(vv[:, None] / ts)], 1)
        val_lin = values[:, None] * w_val + b_val                    # (N, 16)
        unit = np.concatenate([pe_t, val_lin, pe_s], axis=1)          # (N, 48)
        f_prime = unit.mean(axis=0)
        out96[i] = np.concatenate([f_prime, f_prime])
    h = out96 @ w_lin + b_lin
    e = static @ w_emb + b_emb
    z = np.maximum(np.concatenate([h, e], axis=1) @ w_m1 + b_m1, 0.0)
    return z @ w_m2 + b_m2


if __name__ == "__main__":
    key = jax.random.PRNGKey(0)
    k_fea, k_mask, k_junk, k_t, k_s, k_p = jax.random.split(key, 6)

    B, T, V = 4, 16, 8            # batch, time steps, sensors (d_inp)
    d_static, n_classes = 6, 2

    vals = jax.random.normal(k_fea, (T, B, V), jnp.float32)
    keep = jax.random.bernoulli(k_mask, 0.4, (T, B, V))
    fea = jnp.where(keep, vals, 0.0)
    fea = fea.at[:, B - 1, :].set(0.0)   # one fully-empty series (count == 0 path)
    junk = jax.random.normal(k_junk, (T, B, V), jnp.float32)   # unused half of src
    src = jnp.concatenate([fea, junk], axis=2)                 # (T, B, 2*V)

    times = jnp.cumsum(jax.random.uniform(k_t, (T, B), jnp.float32, 0.1, 1.0), axis=0)
    static = jax.random.normal(k_s, (B, d_static), jnp.float32)
    lengths = jnp.full((B,), T, jnp.int32)   # unused by forward (matches PyTorch)

    params = init_seft_params(k_p, d_static, n_classes)

    out = jax.block_until_ready(
        seft_forward(src, static, times, lengths, params, max_len=500))

    ref = seft_reference(src, static, times, params, max_len=500)
    assert out.shape == (B, n_classes)
    assert np.allclose(np.asarray(out), ref, atol=1e-4, rtol=1e-4), \
        float(np.abs(np.asarray(out) - ref).max())

    print("KERNEL_OK")
</pallas_src>

<mosaic_0001>
module attributes {stable_mosaic.version = 11 : i64} {
  func.func @_seft_kernel(%arg0: i32, %arg1: memref<4x8x16xf32, #tpu.memory_space<vmem>>, %arg2: memref<4x16xf32, #tpu.memory_space<vmem>>, %arg3: memref<4x6xf32, #tpu.memory_space<vmem>>, %arg4: memref<1x8x1xf32, #tpu.memory_space<vmem>>, %arg5: memref<16x128xf32, #tpu.memory_space<vmem>>, %arg6: memref<8x128xf32, #tpu.memory_space<vmem>>, %arg7: memref<1x128xf32, #tpu.memory_space<vmem>>, %arg8: memref<1x128xf32, #tpu.memory_space<vmem>>, %arg9: memref<1x128xf32, #tpu.memory_space<vmem>>, %arg10: memref<6x16xf32, #tpu.memory_space<vmem>>, %arg11: memref<1x16xf32, #tpu.memory_space<vmem>>, %arg12: memref<128x144xf32, #tpu.memory_space<vmem>>, %arg13: memref<16x144xf32, #tpu.memory_space<vmem>>, %arg14: memref<1x144xf32, #tpu.memory_space<vmem>>, %arg15: memref<144x2xf32, #tpu.memory_space<vmem>>, %arg16: memref<1x2xf32, #tpu.memory_space<vmem>>, %arg17: memref<4x2xf32, #tpu.memory_space<vmem>>) attributes {dimension_semantics = [#tpu.dimension_semantics<parallel>], iteration_bounds = array<i64: 1>, scalar_prefetch = 0 : i64, scratch_operands = 0 : i64, tpu.core_type = #tpu.core_type<tc>, window_params = [{transform_indices = @transform_0, window_bounds = array<i64: 4, 8, 16>}, {transform_indices = @transform_1, window_bounds = array<i64: 4, 16>}, {transform_indices = @transform_2, window_bounds = array<i64: 4, 6>}, {pipeline_mode = #tpu.pipeline_mode<synchronous>, transform_indices = @transform_3, window_bounds = array<i64: 1, 8, 1>}, {pipeline_mode = #tpu.pipeline_mode<synchronous>, transform_indices = @transform_4, window_bounds = array<i64: 16, 128>}, {pipeline_mode = #tpu.pipeline_mode<synchronous>, transform_indices = @transform_5, window_bounds = array<i64: 8, 128>}, {pipeline_mode = #tpu.pipeline_mode<synchronous>, transform_indices = @transform_6, window_bounds = array<i64: 1, 128>}, {pipeline_mode = #tpu.pipeline_mode<synchronous>, transform_indices = @transform_7, window_bounds = array<i64: 1, 128>}, {pipeline_mode = #tpu.pipeline_mode<synchronous>, transform_indices = @transform_8, window_bounds = array<i64: 1, 128>}, {pipeline_mode = #tpu.pipeline_mode<synchronous>, transform_indices = @transform_9, window_bounds = array<i64: 6, 16>}, {pipeline_mode = #tpu.pipeline_mode<synchronous>, transform_indices = @transform_10, window_bounds = array<i64: 1, 16>}, {pipeline_mode = #tpu.pipeline_mode<synchronous>, transform_indices = @transform_11, window_bounds = array<i64: 128, 144>}, {pipeline_mode = #tpu.pipeline_mode<synchronous>, transform_indices = @transform_12, window_bounds = array<i64: 16, 144>}, {pipeline_mode = #tpu.pipeline_mode<synchronous>, transform_indices = @transform_13, window_bounds = array<i64: 1, 144>}, {pipeline_mode = #tpu.pipeline_mode<synchronous>, transform_indices = @transform_14, window_bounds = array<i64: 144, 2>}, {pipeline_mode = #tpu.pipeline_mode<synchronous>, transform_indices = @transform_15, window_bounds = array<i64: 1, 2>}, {transform_indices = @transform_16, window_bounds = array<i64: 4, 2>}]} {
    %c0 = arith.constant 0 : index
    %c0_0 = arith.constant 0 : index
    %c0_1 = arith.constant 0 : index
    %0 = vector.load %arg1[%c0, %c0_0, %c0_1] : memref<4x8x16xf32, #tpu.memory_space<vmem>>, vector<4x8x16xf32>
    %cst = arith.constant 0.000000e+00 : f32
    %1 = vector.broadcast %cst : f32 to vector<4x8x16xf32>
    %2 = arith.cmpf one, %0, %1 : vector<4x8x16xf32>
    %3 = arith.extui %2 : vector<4x8x16xi1> to vector<4x8x16xi32>
    %4 = arith.sitofp %3 : vector<4x8x16xi32> to vector<4x8x16xf32>
    %cst_2 = arith.constant dense<0.000000e+00> : vector<4x8xf32>
    %5 = vector.multi_reduction <add>, %4, %cst_2 [2] : vector<4x8x16xf32> to vector<4x8xf32>
    %cst_3 = arith.constant dense<0.000000e+00> : vector<4x16xf32>
    %6 = vector.multi_reduction <add>, %4, %cst_3 [1] : vector<4x8x16xf32> to vector<4x16xf32>
    %cst_4 = arith.constant dense<0.000000e+00> : vector<4xf32>
    %7 = vector.multi_reduction <add>, %5, %cst_4 [1] : vector<4x8xf32> to vector<4xf32>
    %8 = vector.shape_cast %7 : vector<4xf32> to vector<4x1xf32>
    %cst_5 = arith.constant dense<0.000000e+00> : vector<4x8xf32>
    %9 = vector.multi_reduction <add>, %0, %cst_5 [2] : vector<4x8x16xf32> to vector<4x8xf32>
    %cst_6 = arith.constant dense<0.000000e+00> : vector<4xf32>
    %10 = vector.multi_reduction <add>, %9, %cst_6 [1] : vector<4x8xf32> to vector<4xf32>
    %11 = vector.shape_cast %10 : vector<4xf32> to vector<4x1xf32>
    %c0_7 = arith.constant 0 : index
    %c0_8 = arith.constant 0 : index
    %12 = vector.load %arg2[%c0_7, %c0_8] : memref<4x16xf32, #tpu.memory_space<vmem>>, vector<4x16xf32>
    %13 = vector.shape_cast %12 : vector<4x16xf32> to vector<4x1x16xf32>
    %c0_9 = arith.constant 0 : index
    %c0_10 = arith.constant 0 : index
    %c0_11 = arith.constant 0 : index
    %14 = vector.load %arg4[%c0_9, %c0_10, %c0_11] : memref<1x8x1xf32, #tpu.memory_space<vmem>>, vector<1x8x1xf32>
    %15 = vector.broadcast %13 : vector<4x1x16xf32> to vector<4x8x16xf32>
    %16 = vector.broadcast %14 : vector<1x8x1xf32> to vector<4x8x16xf32>
    %17 = arith.mulf %15, %16 : vector<4x8x16xf32>
    %18 = vector.shape_cast %6 : vector<4x16xf32> to vector<4x1x16xf32>
    %19 = math.sin %17 : vector<4x8x16xf32>
    %20 = vector.broadcast %18 : vector<4x1x16xf32> to vector<4x8x16xf32>
    %21 = arith.mulf %20, %19 : vector<4x8x16xf32>
    %cst_12 = arith.constant dense<0.000000e+00> : vector<4x8xf32>
    %22 = vector.multi_reduction <add>, %21, %cst_12 [2] : vector<4x8x16xf32> to vector<4x8xf32>
    %23 = math.cos %17 : vector<4x8x16xf32>
    %24 = vector.broadcast %18 : vector<4x1x16xf32> to vector<4x8x16xf32>
    %25 = arith.mulf %24, %23 : vector<4x8x16xf32>
    %cst_13 = arith.constant dense<0.000000e+00> : vector<4x8xf32>
    %26 = vector.multi_reduction <add>, %25, %cst_13 [2] : vector<4x8x16xf32> to vector<4x8xf32>
    %27 = tpu.concatenate %22, %26 in 1 : vector<4x8xf32>, vector<4x8xf32> -> vector<4x16xf32>
    %c0_14 = arith.constant 0 : index
    %c0_15 = arith.constant 0 : index
    %28 = vector.load %arg5[%c0_14, %c0_15] : memref<16x128xf32, #tpu.memory_space<vmem>>, vector<16x128xf32>
    %cst_16 = arith.constant dense<0.000000e+00> : vector<4x128xf32>
    %29 = tpu.matmul %27, %28, %cst_16 {dimension_numbers = #tpu.dot_dimension_numbers<[1], [0], [0], [1], [0, 0, 1, 1], [], []>} : vector<4x16xf32>, vector<16x128xf32>, vector<4x128xf32> -> vector<4x128xf32>
    %c0_17 = arith.constant 0 : index
    %c0_18 = arith.constant 0 : index
    %30 = vector.load %arg6[%c0_17, %c0_18] : memref<8x128xf32, #tpu.memory_space<vmem>>, vector<8x128xf32>
    %cst_19 = arith.constant dense<0.000000e+00> : vector<4x128xf32>
    %31 = tpu.matmul %5, %30, %cst_19 {dimension_numbers = #tpu.dot_dimension_numbers<[1], [0], [0], [1], [0, 0, 1, 1], [], []>} : vector<4x8xf32>, vector<8x128xf32>, vector<4x128xf32> -> vector<4x128xf32>
    %32 = arith.addf %29, %31 : vector<4x128xf32>
    %c0_20 = arith.constant 0 : index
    %c0_21 = arith.constant 0 : index
    %33 = vector.load %arg7[%c0_20, %c0_21] : memref<1x128xf32, #tpu.memory_space<vmem>>, vector<1x128xf32>
    %34 = vector.broadcast %11 : vector<4x1xf32> to vector<4x128xf32>
    %35 = vector.broadcast %33 : vector<1x128xf32> to vector<4x128xf32>
    %36 = arith.mulf %34, %35 : vector<4x128xf32>
    %37 = arith.addf %32, %36 : vector<4x128xf32>
    %c0_22 = arith.constant 0 : index
    %c0_23 = arith.constant 0 : index
    %38 = vector.load %arg8[%c0_22, %c0_23] : memref<1x128xf32, #tpu.memory_space<vmem>>, vector<1x128xf32>
    %39 = vector.broadcast %8 : vector<4x1xf32> to vector<4x128xf32>
    %40 = vector.broadcast %38 : vector<1x128xf32> to vector<4x128xf32>
    %41 = arith.mulf %39, %40 : vector<4x128xf32>
    %42 = arith.addf %37, %41 : vector<4x128xf32>
    %cst_24 = arith.constant 0.000000e+00 : f32
    %43 = vector.broadcast %cst_24 : f32 to vector<4x1xf32>
    %44 = arith.cmpf ogt, %8, %43 : vector<4x1xf32>
    %cst_25 = arith.constant 1.000000e+00 : f32
    %45 = vector.broadcast %cst_25 : f32 to vector<4x1xf32>
    %46 = arith.maximumf %8, %45 : vector<4x1xf32>
    %cst_26 = arith.constant 1.000000e+00 : f32
    %47 = vector.broadcast %cst_26 : f32 to vector<4x1xf32>
    %48 = arith.divf %47, %46 : vector<4x1xf32>
    %cst_27 = arith.constant 0.000000e+00 : f32
    %49 = vector.broadcast %cst_27 : f32 to vector<4x1xf32>
    %50 = arith.select %44, %48, %49 : vector<4x1xi1>, vector<4x1xf32>
    %51 = vector.broadcast %50 : vector<4x1xf32> to vector<4x128xf32>
    %52 = arith.mulf %42, %51 : vector<4x128xf32>
    %c0_28 = arith.constant 0 : index
    %c0_29 = arith.constant 0 : index
    %53 = vector.load %arg9[%c0_28, %c0_29] : memref<1x128xf32, #tpu.memory_space<vmem>>, vector<1x128xf32>
    %54 = vector.broadcast %53 : vector<1x128xf32> to vector<4x128xf32>
    %55 = arith.addf %52, %54 : vector<4x128xf32>
    %c0_30 = arith.constant 0 : index
    %c0_31 = arith.constant 0 : index
    %56 = vector.load %arg3[%c0_30, %c0_31] : memref<4x6xf32, #tpu.memory_space<vmem>>, vector<4x6xf32>
    %c0_32 = arith.constant 0 : index
    %c0_33 = arith.constant 0 : index
    %57 = vector.load %arg10[%c0_32, %c0_33] : memref<6x16xf32, #tpu.memory_space<vmem>>, vector<6x16xf32>
    %cst_34 = arith.constant dense<0.000000e+00> : vector<4x16xf32>
    %58 = tpu.matmul %56, %57, %cst_34 {dimension_numbers = #tpu.dot_dimension_numbers<[1], [0], [0], [1], [0, 0, 1, 1], [], []>} : vector<4x6xf32>, vector<6x16xf32>, vector<4x16xf32> -> vector<4x16xf32>
    %c0_35 = arith.constant 0 : index
    %c0_36 = arith.constant 0 : index
    %59 = vector.load %arg11[%c0_35, %c0_36] : memref<1x16xf32, #tpu.memory_space<vmem>>, vector<1x16xf32>
    %60 = vector.broadcast %59 : vector<1x16xf32> to vector<4x16xf32>
    %61 = arith.addf %58, %60 : vector<4x16xf32>
    %c0_37 = arith.constant 0 : index
    %c0_38 = arith.constant 0 : index
    %62 = vector.load %arg12[%c0_37, %c0_38] : memref<128x144xf32, #tpu.memory_space<vmem>>, vector<128x144xf32>
    %cst_39 = arith.constant dense<0.000000e+00> : vector<4x144xf32>
    %63 = tpu.matmul %55, %62, %cst_39 {dimension_numbers = #tpu.dot_dimension_numbers<[1], [0], [0], [1], [0, 0, 1, 1], [], []>} : vector<4x128xf32>, vector<128x144xf32>, vector<4x144xf32> -> vector<4x144xf32>
    %c0_40 = arith.constant 0 : index
    %c0_41 = arith.constant 0 : index
    %64 = vector.load %arg13[%c0_40, %c0_41] : memref<16x144xf32, #tpu.memory_space<vmem>>, vector<16x144xf32>
    %cst_42 = arith.constant dense<0.000000e+00> : vector<4x144xf32>
    %65 = tpu.matmul %61, %64, %cst_42 {dimension_numbers = #tpu.dot_dimension_numbers<[1], [0], [0], [1], [0, 0, 1, 1], [], []>} : vector<4x16xf32>, vector<16x144xf32>, vector<4x144xf32> -> vector<4x144xf32>
    %66 = arith.addf %63, %65 : vector<4x144xf32>
    %c0_43 = arith.constant 0 : index
    %c0_44 = arith.constant 0 : index
    %67 = vector.load %arg14[%c0_43, %c0_44] : memref<1x144xf32, #tpu.memory_space<vmem>>, vector<1x144xf32>
    %68 = vector.broadcast %67 : vector<1x144xf32> to vector<4x144xf32>
    %69 = arith.addf %66, %68 : vector<4x144xf32>
    %cst_45 = arith.constant 0.000000e+00 : f32
    %70 = vector.broadcast %cst_45 : f32 to vector<4x144xf32>
    %71 = arith.maximumf %69, %70 : vector<4x144xf32>
    %c0_46 = arith.constant 0 : index
    %c0_47 = arith.constant 0 : index
    %72 = vector.load %arg15[%c0_46, %c0_47] : memref<144x2xf32, #tpu.memory_space<vmem>>, vector<144x2xf32>
    %cst_48 = arith.constant dense<0.000000e+00> : vector<4x2xf32>
    %73 = tpu.matmul %71, %72, %cst_48 {dimension_numbers = #tpu.dot_dimension_numbers<[1], [0], [0], [1], [0, 0, 1, 1], [], []>} : vector<4x144xf32>, vector<144x2xf32>, vector<4x2xf32> -> vector<4x2xf32>
    %c0_49 = arith.constant 0 : index
    %c0_50 = arith.constant 0 : index
    %74 = vector.load %arg16[%c0_49, %c0_50] : memref<1x2xf32, #tpu.memory_space<vmem>>, vector<1x2xf32>
    %75 = vector.broadcast %74 : vector<1x2xf32> to vector<4x2xf32>
    %76 = arith.addf %73, %75 : vector<4x2xf32>
    %c0_51 = arith.constant 0 : index
    %c0_52 = arith.constant 0 : index
    %77 = vector.load %arg17[%c0_51, %c0_52] : memref<4x2xf32, #tpu.memory_space<vmem>>, vector<4x2xf32>
    tpu.vector_store %arg17[%c0_51, %c0_52], %76 {strides = array<i32>} : memref<4x2xf32, #tpu.memory_space<vmem>>, vector<4x2xf32>,
    return
  }
  func.func @transform_0(%arg0: i32) -> (i32, i32, i32) {
    %c0_i32 = arith.constant 0 : i32
    %c0_i32_0 = arith.constant 0 : i32
    %c0_i32_1 = arith.constant 0 : i32
    return %arg0, %c0_i32, %c0_i32_0 : i32, i32, i32
  }
  func.func @transform_1(%arg0: i32) -> (i32, i32) {
    %c0_i32 = arith.constant 0 : i32
    %c0_i32_0 = arith.constant 0 : i32
    return %arg0, %c0_i32 : i32, i32
  }
  func.func @transform_2(%arg0: i32) -> (i32, i32) {
    %c0_i32 = arith.constant 0 : i32
    %c0_i32_0 = arith.constant 0 : i32
    return %arg0, %c0_i32 : i32, i32
  }
  func.func @transform_3(%arg0: i32) -> (i32, i32, i32) {
    %c0_i32 = arith.constant 0 : i32
    %c0_i32_0 = arith.constant 0 : i32
    %c0_i32_1 = arith.constant 0 : i32
    %c0_i32_2 = arith.constant 0 : i32
    return %c0_i32, %c0_i32_0, %c0_i32_1 : i32, i32, i32
  }
  func.func @transform_4(%arg0: i32) -> (i32, i32) {
    %c0_i32 = arith.constant 0 : i32
    %c0_i32_0 = arith.constant 0 : i32
    %c0_i32_1 = arith.constant 0 : i32
    return %c0_i32, %c0_i32_0 : i32, i32
  }
  func.func @transform_5(%arg0: i32) -> (i32, i32) {
    %c0_i32 = arith.constant 0 : i32
    %c0_i32_0 = arith.constant 0 : i32
    %c0_i32_1 = arith.constant 0 : i32
    return %c0_i32, %c0_i32_0 : i32, i32
  }
  func.func @transform_6(%arg0: i32) -> (i32, i32) {
    %c0_i32 = arith.constant 0 : i32
    %c0_i32_0 = arith.constant 0 : i32
    %c0_i32_1 = arith.constant 0 : i32
    return %c0_i32, %c0_i32_0 : i32, i32
  }
  func.func @transform_7(%arg0: i32) -> (i32, i32) {
    %c0_i32 = arith.constant 0 : i32
    %c0_i32_0 = arith.constant 0 : i32
    %c0_i32_1 = arith.constant 0 : i32
    return %c0_i32, %c0_i32_0 : i32, i32
  }
  func.func @transform_8(%arg0: i32) -> (i32, i32) {
    %c0_i32 = arith.constant 0 : i32
    %c0_i32_0 = arith.constant 0 : i32
    %c0_i32_1 = arith.constant 0 : i32
    return %c0_i32, %c0_i32_0 : i32, i32
  }
  func.func @transform_9(%arg0: i32) -> (i32, i32) {
    %c0_i32 = arith.constant 0 : i32
    %c0_i32_0 = arith.constant 0 : i32
    %c0_i32_1 = arith.constant 0 : i32
    return %c0_i32, %c0_i32_0 : i32, i32
  }
  func.func @transform_10(%arg0: i32) -> (i32, i32) {
    %c0_i32 = arith.constant 0 : i32
    %c0_i32_0 = arith.constant 0 : i32
    %c0_i32_1 = arith.constant 0 : i32
    return %c0_i32, %c0_i32_0 : i32, i32
  }
  func.func @transform_11(%arg0: i32) -> (i32, i32) {
    %c0_i32 = arith.constant 0 : i32
    %c0_i32_0 = arith.constant 0 : i32
    %c0_i32_1 = arith.constant 0 : i32
    return %c0_i32, %c0_i32_0 : i32, i32
  }
  func.func @transform_12(%arg0: i32) -> (i32, i32) {
    %c0_i32 = arith.constant 0 : i32
    %c0_i32_0 = arith.constant 0 : i32
    %c0_i32_1 = arith.constant 0 : i32
    return %c0_i32, %c0_i32_0 : i32, i32
  }
  func.func @transform_13(%arg0: i32) -> (i32, i32) {
    %c0_i32 = arith.constant 0 : i32
    %c0_i32_0 = arith.constant 0 : i32
    %c0_i32_1 = arith.constant 0 : i32
    return %c0_i32, %c0_i32_0 : i32, i32
  }
  func.func @transform_14(%arg0: i32) -> (i32, i32) {
    %c0_i32 = arith.constant 0 : i32
    %c0_i32_0 = arith.constant 0 : i32
    %c0_i32_1 = arith.constant 0 : i32
    return %c0_i32, %c0_i32_0 : i32, i32
  }
  func.func @transform_15(%arg0: i32) -> (i32, i32) {
    %c0_i32 = arith.constant 0 : i32
    %c0_i32_0 = arith.constant 0 : i32
    %c0_i32_1 = arith.constant 0 : i32
    return %c0_i32, %c0_i32_0 : i32, i32
  }
  func.func @transform_16(%arg0: i32) -> (i32, i32) {
    %c0_i32 = arith.constant 0 : i32
    %c0_i32_0 = arith.constant 0 : i32
    return %arg0, %c0_i32 : i32, i32
  }
}

</mosaic_0001>

<llo_original>
// kernel: seft_forward.1
$region0: #{seft_forward.1}
  #allocation0 [shape = 'u32[]', space=smem, size = 0x4, offset = 0x4, fixed_abs, tag = 'smem constant byte address 0x4 - core index']
  #allocation1 [shape = 'u32[144,128]{1,0:T(1,128)}', space=vmem, size = 0x12000, scoped, tag = 'internal scratch']
  %s0 = inlined_call_operand.vmem [shape: f32[4,8,16], index: 0, kind: input, shape index: {}]
  %s1 = inlined_call_operand.vmem [shape: f32[4,16], index: 1, kind: input, shape index: {}]
  %s2 = inlined_call_operand.vmem [shape: f32[4,6], index: 2, kind: input, shape index: {}]
  %s3 = inlined_call_operand.vmem [shape: f32[1,8,1], index: 3, kind: input, shape index: {}]
  %s4 = inlined_call_operand.vmem [shape: f32[16,128], index: 4, kind: input, shape index: {}]
  %s5 = inlined_call_operand.vmem [shape: f32[8,128], index: 5, kind: input, shape index: {}]
  %s6 = inlined_call_operand.vmem [shape: f32[1,128], index: 6, kind: input, shape index: {}]
  %s7 = inlined_call_operand.vmem [shape: f32[1,128], index: 7, kind: input, shape index: {}]
  %s8 = inlined_call_operand.vmem [shape: f32[1,128], index: 8, kind: input, shape index: {}]
  %s9 = inlined_call_operand.vmem [shape: f32[6,16], index: 9, kind: input, shape index: {}]
  %s10 = inlined_call_operand.vmem [shape: f32[1,16], index: 10, kind: input, shape index: {}]
  %s11 = inlined_call_operand.vmem [shape: f32[128,144], index: 11, kind: input, shape index: {}]
  %s12 = inlined_call_operand.vmem [shape: f32[16,144], index: 12, kind: input, shape index: {}]
  %s13 = inlined_call_operand.vmem [shape: f32[1,144], index: 13, kind: input, shape index: {}]
  %s14 = inlined_call_operand.vmem [shape: f32[144,2], index: 14, kind: input, shape index: {}]
  %s15 = inlined_call_operand.vmem [shape: f32[1,2], index: 15, kind: input, shape index: {}]
  %s16 = inlined_call_operand.vmem [shape: f32[4,2], index: 16, kind: output, shape index: {}]
  %s17 = sld [smem:[#allocation0]]
  $region74: #{seft_forward.1} parent=0
    _
  %s19 = ssub.s32 1, %s17
  %s20 = scalar_select 0, %s19, %s17
  // Predicated region
  $region2: #{seft_forward.1} parent=0 // pred_check
    _
  $region3: #{seft_forward.1} parent=0 // pred_check_branch
    %22 = sbr.rel (0) target = $region5
  $region4: #{seft_forward.1} parent=0 // pred_region
    _
  $region5: #{seft_forward.1} parent=0 // pred_fallthru
    _
  // Predicated region
  $region6: #{seft_forward.1} parent=0 // pred_check
    _
  $region7: #{seft_forward.1} parent=0 // pred_check_branch
    %24 = sbr.rel (0) target = $region9
  $region8: #{seft_forward.1} parent=0 // pred_region
    _
  $region9: #{seft_forward.1} parent=0 // pred_fallthru
    _
  // Predicated region
  $region10: #{seft_forward.1} parent=0 // pred_check
    _
  $region11: #{seft_forward.1} parent=0 // pred_check_branch
    %26 = sbr.rel (0) target = $region13
  $region12: #{seft_forward.1} parent=0 // pred_region
    _
  $region13: #{seft_forward.1} parent=0 // pred_fallthru
    _
  // Predicated region
  $region14: #{seft_forward.1} parent=0 // pred_check
    _
  $region15: #{seft_forward.1} parent=0 // pred_check_branch
    %28 = sbr.rel (0) target = $region17
  $region16: #{seft_forward.1} parent=0 // pred_region
    _
  $region17: #{seft_forward.1} parent=0 // pred_fallthru
    _
  // Predicated region
  $region18: #{seft_forward.1} parent=0 // pred_check
    _
  $region19: #{seft_forward.1} parent=0 // pred_check_branch
    %30 = sbr.rel (0) target = $region21
  $region20: #{seft_forward.1} parent=0 // pred_region
    _
  $region21: #{seft_forward.1} parent=0 // pred_fallthru
    _
  // Predicated region
  $region22: #{seft_forward.1} parent=0 // pred_check
    _
  $region23: #{seft_forward.1} parent=0 // pred_check_branch
    %32 = sbr.rel (0) target = $region25
  $region24: #{seft_forward.1} parent=0 // pred_region
    _
  $region25: #{seft_forward.1} parent=0 // pred_fallthru
    _
  // Predicated region
  $region26: #{seft_forward.1} parent=0 // pred_check
    _
  $region27: #{seft_forward.1} parent=0 // pred_check_branch
    %34 = sbr.rel (0) target = $region29
  $region28: #{seft_forward.1} parent=0 // pred_region
    _
  $region29: #{seft_forward.1} parent=0 // pred_fallthru
    _
  // Predicated region
  $region30: #{seft_forward.1} parent=0 // pred_check
    _
  $region31: #{seft_forward.1} parent=0 // pred_check_branch
    %36 = sbr.rel (0) target = $region33
  $region32: #{seft_forward.1} parent=0 // pred_region
    _
  $region33: #{seft_forward.1} parent=0 // pred_fallthru
    _
  // Predicated region
  $region34: #{seft_forward.1} parent=0 // pred_check
    _
  $region35: #{seft_forward.1} parent=0 // pred_check_branch
    %38 = sbr.rel (0) target = $region37
  $region36: #{seft_forward.1} parent=0 // pred_region
    _
  $region37: #{seft_forward.1} parent=0 // pred_fallthru
    _
  // Predicated region
  $region38: #{seft_forward.1} parent=0 // pred_check
    _
  $region39: #{seft_forward.1} parent=0 // pred_check_branch
    %40 = sbr.rel (0) target = $region41
  $region40: #{seft_forward.1} parent=0 // pred_region
    _
  $region41: #{seft_forward.1} parent=0 // pred_fallthru
    _
  // Predicated region
  $region42: #{seft_forward.1} parent=0 // pred_check
    _
  $region43: #{seft_forward.1} parent=0 // pred_check_branch
    %42 = sbr.rel (0) target = $region45
  $region44: #{seft_forward.1} parent=0 // pred_region
    _
  $region45: #{seft_forward.1} parent=0 // pred_fallthru
    _
  // Predicated region
  $region46: #{seft_forward.1} parent=0 // pred_check
    _
  $region47: #{seft_forward.1} parent=0 // pred_check_branch
    %44 = sbr.rel (0) target = $region49
  $region48: #{seft_forward.1} parent=0 // pred_region
    _
  $region49: #{seft_forward.1} parent=0 // pred_fallthru
    _
  // Predicated region
  $region50: #{seft_forward.1} parent=0 // pred_check
    _
  $region51: #{seft_forward.1} parent=0 // pred_check_branch
    %46 = sbr.rel (0) target = $region53
  $region52: #{seft_forward.1} parent=0 // pred_region
    _
  $region53: #{seft_forward.1} parent=0 // pred_fallthru
    _
  // Predicated region
  $region54: #{seft_forward.1} parent=0 // pred_check
    _
  $region55: #{seft_forward.1} parent=0 // pred_check_branch
    %48 = sbr.rel (0) target = $region57
  $region56: #{seft_forward.1} parent=0 // pred_region
    _
  $region57: #{seft_forward.1} parent=0 // pred_fallthru
    _
  // Predicated region
  $region58: #{seft_forward.1} parent=0 // pred_check
    _
  $region59: #{seft_forward.1} parent=0 // pred_check_branch
    %50 = sbr.rel (0) target = $region61
  $region60: #{seft_forward.1} parent=0 // pred_region
    _
  $region61: #{seft_forward.1} parent=0 // pred_fallthru
    _
  // Predicated region
  $region62: #{seft_forward.1} parent=0 // pred_check
    _
  $region63: #{seft_forward.1} parent=0 // pred_check_branch
    %52 = sbr.rel (0) target = $region65
  $region64: #{seft_forward.1} parent=0 // pred_region
    _
  $region65: #{seft_forward.1} parent=0 // pred_fallthru
    _
  %v53 = vld [vmem:[%s0] sm:$0xff]
  %v54 = vld [vmem:[%s0 + $0x8] sm:$0xff]
  %v55 = vld [vmem:[%s0 + $0x10] sm:$0xff]
  %v56 = vld [vmem:[%s0 + $0x18] sm:$0xff]
  %vm57 = vcmp.ne.f32.partialorder %v53, 0.0
  %vm58 = vcmp.ne.f32.partialorder %v54, 0.0
  %vm59 = vcmp.ne.f32.partialorder %v55, 0.0
  %vm60 = vcmp.ne.f32.partialorder %v56, 0.0
  %v61 = vsel %vm57, 1, 0
  %v62 = vsel %vm58, 1, 0
  %v63 = vsel %vm59, 1, 0
  %v64 = vsel %vm60, 1, 0
  %v65 = vcvt.s32.f32 %v61
  %v66 = vcvt.s32.f32 %v62
  %v67 = vcvt.s32.f32 %v63
  %v68 = vcvt.s32.f32 %v64
  %vm69 = vcmask 130048
  %v70 = vsel %vm69, %v65, 0.0
  %71 = vadd.xlane.f32.xlu0 %v70
  %v72 = vpop.xlane.xlu0 %71
  %v73 = vsel %vm69, %v66, 0.0
  %74 = vadd.xlane.f32.xlu0 %v73
  %v75 = vpop.xlane.xlu0 %74
  %v76 = vsel %vm69, %v67, 0.0
  %77 = vadd.xlane.f32.xlu0 %v76
  %v78 = vpop.xlane.xlu0 %77
  %v79 = vsel %vm69, %v68, 0.0
  %80 = vadd.xlane.f32.xlu0 %v79
  %v81 = vpop.xlane.xlu0 %80
  %v82 = vrot.slane %v70, 4
  %v83 = vadd.f32 %v70, %v82
  %v84 = vrot.slane %v83, 2
  %v85 = vadd.f32 %v83, %v84
  %v86 = vrot.slane %v85, 1
  %v87 = vadd.f32 %v85, %v86
  %v88 = vrot.slane %v73, 4
  %v89 = vadd.f32 %v73, %v88
  %v90 = vrot.slane %v89, 2
  %v91 = vadd.f32 %v89, %v90
  %v92 = vrot.slane %v91, 1
  %v93 = vadd.f32 %v91, %v92
  %v94 = vrot.slane %v76, 4
  %v95 = vadd.f32 %v76, %v94
  %v96 = vrot.slane %v95, 2
  %v97 = vadd.f32 %v95, %v96
  %v98 = vrot.slane %v97, 1
  %v99 = vadd.f32 %v97, %v98
  %v100 = vrot.slane %v79, 4
  %v101 = vadd.f32 %v79, %v100
  %v102 = vrot.slane %v101, 2
  %v103 = vadd.f32 %v101, %v102
  %v104 = vrot.slane %v103, 1
  %v105 = vadd.f32 %v103, %v104
  %v110 = vlaneseq
  %v111 = vand.u32 %v110, 127
  %v112 = vlaneseq
  %v113 = vshrl.u32 %v112, 7
  %v114 = vsub.s32 %v111, %v113
  %v115 = vrot.slane %v72, %v114
  %v116 = vlaneseq
  %v117 = vshrl.u32 %v116, 7
  %v118 = vsub.s32 %v111, %v117
  %v119 = vrot.slane %v75, %v118
  %v120 = vlaneseq
  %v121 = vshrl.u32 %v120, 7
  %v122 = vsub.s32 %v111, %v121
  %v123 = vrot.slane %v78, %v122
  %v124 = vlaneseq
  %v125 = vshrl.u32 %v124, 7
  %v126 = vsub.s32 %v111, %v125
  %v127 = vrot.slane %v81, %v126
  %vm128 = vcmask 1041409
  %v129 = vsel %vm128, %v119, %v115
  %vm130 = vcmask 1042434
  %v131 = vsel %vm130, %v123, %v129
  %vm132 = vcmask 1043459
  %v133 = vsel %vm132, %v127, %v131
  %vm135 = vcmask 60416
  %v136 = vsel %vm135, %v133, 0.0
  %137 = vadd.xlane.f32.xlu0 %v136
  %v138 = vpop.xlane.xlu0 %137
  %v139 = vsel %vm69, %v53, 0.0
  %140 = vadd.xlane.f32.xlu0 %v139
  %v141 = vpop.xlane.xlu0 %140
  %v142 = vsel %vm69, %v54, 0.0
  %143 = vadd.xlane.f32.xlu0 %v142
  %v144 = vpop.xlane.xlu0 %143
  %v145 = vsel %vm69, %v55, 0.0
  %146 = vadd.xlane.f32.xlu0 %v145
  %v147 = vpop.xlane.xlu0 %146
  %v148 = vsel %vm69, %v56, 0.0
  %149 = vadd.xlane.f32.xlu0 %v148
  %v150 = vpop.xlane.xlu0 %149
  %v155 = vlaneseq
  %v156 = vshrl.u32 %v155, 7
  %v157 = vsub.s32 %v111, %v156
  %v158 = vrot.slane %v141, %v157
  %v159 = vlaneseq
  %v160 = vshrl.u32 %v159, 7
  %v161 = vsub.s32 %v111, %v160
  %v162 = vrot.slane %v144, %v161
  %v163 = vlaneseq
  %v164 = vshrl.u32 %v163, 7
  %v165 = vsub.s32 %v111, %v164
  %v166 = vrot.slane %v147, %v165
  %v167 = vlaneseq
  %v168 = vshrl.u32 %v167, 7
  %v169 = vsub.s32 %v111, %v168
  %v170 = vrot.slane %v150, %v169
  %v171 = vsel %vm128, %v162, %v158
  %v172 = vsel %vm130, %v166, %v171
  %v173 = vsel %vm132, %v170, %v172
  %v175 = vsel %vm135, %v173, 0.0
  %176 = vadd.xlane.f32.xlu0 %v175
  %v177 = vpop.xlane.xlu0 %176
  %v178 = vld [vmem:[%s1] sm:$0xf]
  %v181 = vunpack.c.l.s4 1966171168
  %v182 = vunpack.c.0.s8 %v181
  %v183 = vlaneseq
  %v184 = vshrl.u32 %v183, 7
  %v185 = vsub.s32 %v182, %v184
  %v186 = vrot.slane %v178, %v185
  %v187 = vcombine.high %v186, %v186
  %v189 = vunpack.c.l.s4 1966171168
  %v190 = vunpack.c.0.s8 %v189
  %v191 = vlaneseq
  %v192 = vshrl.u32 %v191, 7
  %v193 = vsub.s32 %v190, %v192
  %v194 = vrot.slane %v186, %v193
  %v196 = vunpack.c.l.s4 1966171168
  %v197 = vunpack.c.0.s8 %v196
  %v198 = vlaneseq
  %v199 = vshrl.u32 %v198, 7
  %v200 = vsub.s32 %v197, %v199
  %v201 = vrot.slane %v187, %v200
  %v202 = vcombine.high %v194, %v194
  %v203 = vcombine.high %v201, %v201
  %v204 = vld [vmem:[%s3] sm:$0xff]
  %v205 = vlaneseq
  %v206 = vshrl.u32 %v205, 7
  %v207 = vsub.s32 0, %v206
  %v208 = vrot.slane %v194, %v207
  %v209 = vlaneseq
  %v210 = vshrl.u32 %v209, 7
  %v211 = vsub.s32 0, %v210
  %v212 = vrot.slane %v201, %v211
  %v213 = vlaneseq
  %v214 = vshrl.u32 %v213, 7
  %v215 = vsub.s32 0, %v214
  %v216 = vrot.slane %v202, %v215
  %v217 = vlaneseq
  %v218 = vshrl.u32 %v217, 7
  %v219 = vsub.s32 0, %v218
  %v220 = vrot.slane %v203, %v219
  %226 = vset.pattern.permute.xlu0 0
  %227 = vperm.xlu0 %226, %v204
  %v228 = vpop.permute.xlu0 %227
  %v230 = vmul.f32 %v208, %v228
  %v231 = vmul.f32 %v212, %v228
  %v232 = vmul.f32 %v216, %v228
  %v233 = vmul.f32 %v220, %v228
  %v234 = vand.u32 2147483647, %v230
  %vm235 = vcmp.le.f32.partialorder %v234, 0.7853982
  %vm236 = vcmp.lt.s32.totalorder %v230, 0
  %v237 = vand.u32 %v230, 2139095040
  %v238 = vshrl.u32 %v237, 23
  %v239 = vsub.s32 %v238, 127
  %v240 = vand.u32 2147483647, %v230
  %v241 = vand.u32 %v240, 8388607
  %v242 = vor.u32 %v241, 8388608
  %v243 = vsub.s32 0, %v242
  %v244 = vadd.s32 %v239, 1
  %vm245 = vcmp.gt.s32.totalorder %v244, 0
  %v246 = vsel %vm245, %v244, 0
  %v247 = vshrl.u32 %v246, 5
  %v248 = vand.u32 %v246, 31
  %v249 = vsub.s32 32, %v248
  %v250 = vshrl.u32 683565275, %v249
  %v251 = vshll.u32 683565275, %v248
  %v252 = vshrl.u32 2475754826, %v249
  %v253 = vor.u32 %v251, %v252
  %v254 = vshll.u32 2475754826, %v248
  %v255 = vshrl.u32 2131351028, %v249
  %v256 = vor.u32 %v254, %v255
  %v257 = vshll.u32 2131351028, %v248
  %v258 = vshrl.u32 2102212464, %v249
  %v259 = vor.u32 %v257, %v258
  %v260 = vshll.u32 2102212464, %v248
  %v261 = vshrl.u32 920167782, %v249
  %v262 = vor.u32 %v260, %v261
  %v263 = vshll.u32 920167782, %v248
  %v264 = vshrl.u32 1326507024, %v249
  %v265 = vor.u32 %v263, %v264
  %vm266 = vcmp.lt.s32.totalorder %v247, 1
  %vm267 = vcmp.lt.s32.totalorder %v247, 2
  %vm268 = vcmp.lt.s32.totalorder %v247, 3
  %vm269 = vcmp.lt.s32.totalorder %v247, 4
  %v270 = vsel %vm266, %v250, %v253
  %v271 = vsel %vm269, %v259, 2102212464
  %v272 = vsel %vm268, %v256, %v271
  %v273 = vsel %vm267, %v270, %v272
  %v274 = vsel %vm266, %v253, %v256
  %v275 = vsel %vm269, %v262, 920167782
  %v276 = vsel %vm268, %v259, %v275
  %v277 = vsel %vm267, %v274, %v276
  %v278 = vsel %vm266, %v256, %v259
  %v279 = vsel %vm269, %v265, 1326507024
  %v280 = vsel %vm268, %v262, %v279
  %v281 = vsel %vm267, %v278, %v280
  %v282 = vshll.u32 %v242, 8
  %v283 = vmul.u32.u64.compose %v282, %v281
  %v284 = vextract.low.u32 %v283
  %v285 = vextract.high.u32 %v283
  %v286 = vmul.u32.u64.compose %v282, %v277
  %v287 = vextract.low.u32 %v286
  %v288 = vextract.high.u32 %v286
  %v289 = vmul.u32 %v282, %v273
  %v290 = vadd.s32 %v285, %v287
  %vm291 = vc.u32 %v285, %v287
  %v292 = vadd.s32 %v288, 1
  %v293 = vsel %vm291, %v292, %v288
  %v294 = vadd.s32 %v289, %v293
  %v295 = vadd.s32 %v294, 536870912
  %v296 = vshrl.u32 %v295, 30
  %v297 = vshll.u32 %v296, 30
  %v298 = vsub.s32 %v294, %v297
  %vm299 = vcmp.lt.s32.totalorder %v298, 0
  %v300 = vsub.s32 0, %v298
  %v301 = vsel %vm299, %v300, %v298
  %v302 = vclz %v301
  %v303 = vsub.s32 %v302, 2
  %vm304 = vcmp.gt.s32.totalorder 0, %v303
  %v305 = vsel %vm304, 0, %v303
  %v306 = vsub.s32 32, %v305
  %v307 = vshll.u32 %v298, %v305
  %v308 = vshrl.u32 %v290, %v306
  %v309 = vor.u32 %v307, %v308
  %v310 = vsub.s32 4294967266, %v305
  %v311 = vadd.s32 %v310, 127
  %v312 = vshll.u32 %v311, 23
  %v313 = vor.u32 4788187, %v312
  %v314 = vand.u32 2147483647, %v313
  %v316 = vcvt.s32.f32 %v309
  %v317 = vmul.f32 %v316, %v314
  %v318 = vxor.u32 %v317, 2147483648
  %v319 = vsel %vm236, %v318, %v317
  %v320 = vsub.s32 4, %v296
  %v321 = vsel %vm236, %v320, %v296
  %v322 = vsel %vm235, %v230, %v319
  %v323 = vsel %vm235, 0, %v321
  %v324 = vcosq.f32.pop %v322
  %v325 = vsinq.f32.pop %v322
  %vm326 = vweird.f32 %v230
  %v327 = vadd.s32 %v323, 3
  %v328 = vand.u32 %v327, 3
  %vm329 = vcmp.lt.s32.totalorder %v328, 2
  %vm330 = vcmp.eq.s32.totalorder %v328, 0
  %v331 = vxor.u32 %v325, 2147483648
  %v332 = vsel %vm330, %v324, %v331
  %vm333 = vcmp.eq.s32.totalorder %v328, 2
  %v334 = vxor.u32 %v324, 2147483648
  %v335 = vsel %vm333, %v334, %v325
  %v336 = vsel %vm329, %v332, %v335
  %v337 = vsel %vm326, nan, %v336
  %v338 = vand.u32 2147483647, %v231
  %vm339 = vcmp.le.f32.partialorder %v338, 0.7853982
  %vm340 = vcmp.lt.s32.totalorder %v231, 0
  %v341 = vand.u32 %v231, 2139095040
  %v342 = vshrl.u32 %v341, 23
  %v343 = vsub.s32 %v342, 127
  %v344 = vand.u32 2147483647, %v231
  %v345 = vand.u32 %v344, 8388607
  %v346 = vor.u32 %v345, 8388608
  %v347 = vsub.s32 0, %v346
  %v348 = vadd.s32 %v343, 1
  %vm349 = vcmp.gt.s32.totalorder %v348, 0
  %v350 = vsel %vm349, %v348, 0
  %v351 = vshrl.u32 %v350, 5
  %v352 = vand.u32 %v350, 31
  %v353 = vsub.s32 32, %v352
  %v354 = vshrl.u32 683565275, %v353
  %v355 = vshll.u32 683565275, %v352
  %v356 = vshrl.u32 2475754826, %v353
  %v357 = vor.u32 %v355, %v356
  %v358 = vshll.u32 2475754826, %v352
  %v359 = vshrl.u32 2131351028, %v353
  %v360 = vor.u32 %v358, %v359
  %v361 = vshll.u32 2131351028, %v352
  %v362 = vshrl.u32 2102212464, %v353
  %v363 = vor.u32 %v361, %v362
  %v364 = vshll.u32 2102212464, %v352
  %v365 = vshrl.u32 920167782, %v353
  %v366 = vor.u32 %v364, %v365
  %v367 = vshll.u32 920167782, %v352
  %v368 = vshrl.u32 1326507024, %v353
  %v369 = vor.u32 %v367, %v368
  %vm370 = vcmp.lt.s32.totalorder %v351, 1
  %vm371 = vcmp.lt.s32.totalorder %v351, 2
  %vm372 = vcmp.lt.s32.totalorder %v351, 3
  %vm373 = vcmp.lt.s32.totalorder %v351, 4
  %v374 = vsel %vm370, %v354, %v357
  %v375 = vsel %vm373, %v363, 2102212464
  %v376 = vsel %vm372, %v360, %v375
  %v377 = vsel %vm371, %v374, %v376
  %v378 = vsel %vm370, %v357, %v360
  %v379 = vsel %vm373, %v366, 920167782
  %v380 = vsel %vm372, %v363, %v379
  %v381 = vsel %vm371, %v378, %v380
  %v382 = vsel %vm370, %v360, %v363
  %v383 = vsel %vm373, %v369, 1326507024
  %v384 = vsel %vm372, %v366, %v383
  %v385 = vsel %vm371, %v382, %v384
  %v386 = vshll.u32 %v346, 8
  %v387 = vmul.u32.u64.compose %v386, %v385
  %v388 = vextract.low.u32 %v387
  %v389 = vextract.high.u32 %v387
  %v390 = vmul.u32.u64.compose %v386, %v381
  %v391 = vextract.low.u32 %v390
  %v392 = vextract.high.u32 %v390
  %v393 = vmul.u32 %v386, %v377
  %v394 = vadd.s32 %v389, %v391
  %vm395 = vc.u32 %v389, %v391
  %v396 = vadd.s32 %v392, 1
  %v397 = vsel %vm395, %v396, %v392
  %v398 = vadd.s32 %v393, %v397
  %v399 = vadd.s32 %v398, 536870912
  %v400 = vshrl.u32 %v399, 30
  %v401 = vshll.u32 %v400, 30
  %v402 = vsub.s32 %v398, %v401
  %vm403 = vcmp.lt.s32.totalorder %v402, 0
  %v404 = vsub.s32 0, %v402
  %v405 = vsel %vm403, %v404, %v402
  %v406 = vclz %v405
  %v407 = vsub.s32 %v406, 2
  %vm408 = vcmp.gt.s32.totalorder 0, %v407
  %v409 = vsel %vm408, 0, %v407
  %v410 = vsub.s32 32, %v409
  %v411 = vshll.u32 %v402, %v409
  %v412 = vshrl.u32 %v394, %v410
  %v413 = vor.u32 %v411, %v412
  %v414 = vsub.s32 4294967266, %v409
  %v415 = vadd.s32 %v414, 127
  %v416 = vshll.u32 %v415, 23
  %v417 = vor.u32 4788187, %v416
  %v418 = vand.u32 2147483647, %v417
  %v420 = vcvt.s32.f32 %v413
  %v421 = vmul.f32 %v420, %v418
  %v422 = vxor.u32 %v421, 2147483648
  %v423 = vsel %vm340, %v422, %v421
  %v424 = vsub.s32 4, %v400
  %v425 = vsel %vm340, %v424, %v400
  %v426 = vsel %vm339, %v231, %v423
  %v427 = vsel %vm339, 0, %v425
  %v428 = vcosq.f32.pop %v426
  %v429 = vsinq.f32.pop %v426
  %vm430 = vweird.f32 %v231
  %v431 = vadd.s32 %v427, 3
  %v432 = vand.u32 %v431, 3
  %vm433 = vcmp.lt.s32.totalorder %v432, 2
  %vm434 = vcmp.eq.s32.totalorder %v432, 0
  %v435 = vxor.u32 %v429, 2147483648
  %v436 = vsel %vm434, %v428, %v435
  %vm437 = vcmp.eq.s32.totalorder %v432, 2
  %v438 = vxor.u32 %v428, 2147483648
  %v439 = vsel %vm437, %v438, %v429
  %v440 = vsel %vm433, %v436, %v439
  %v441 = vsel %vm430, nan, %v440
  %v442 = vand.u32 2147483647, %v232
  %vm443 = vcmp.le.f32.partialorder %v442, 0.7853982
  %vm444 = vcmp.lt.s32.totalorder %v232, 0
  %v445 = vand.u32 %v232, 2139095040
  %v446 = vshrl.u32 %v445, 23
  %v447 = vsub.s32 %v446, 127
  %v448 = vand.u32 2147483647, %v232
  %v449 = vand.u32 %v448, 8388607
  %v450 = vor.u32 %v449, 8388608
  %v451 = vsub.s32 0, %v450
  %v452 = vadd.s32 %v447, 1
  %vm453 = vcmp.gt.s32.totalorder %v452, 0
  %v454 = vsel %vm453, %v452, 0
  %v455 = vshrl.u32 %v454, 5
  %v456 = vand.u32 %v454, 31
  %v457 = vsub.s32 32, %v456
  %v458 = vshrl.u32 683565275, %v457
  %v459 = vshll.u32 683565275, %v456
  %v460 = vshrl.u32 2475754826, %v457
  %v461 = vor.u32 %v459, %v460
  %v462 = vshll.u32 2475754826, %v456
  %v463 = vshrl.u32 2131351028, %v457
  %v464 = vor.u32 %v462, %v463
  %v465 = vshll.u32 2131351028, %v456
  %v466 = vshrl.u32 2102212464, %v457
  %v467 = vor.u32 %v465, %v466
  %v468 = vshll.u32 2102212464, %v456
  %v469 = vshrl.u32 920167782, %v457
  %v470 = vor.u32 %v468, %v469
  %v471 = vshll.u32 920167782, %v456
  %v472 = vshrl.u32 1326507024, %v457
  %v473 = vor.u32 %v471, %v472
  %vm474 = vcmp.lt.s32.totalorder %v455, 1
  %vm475 = vcmp.lt.s32.totalorder %v455, 2
  %vm476 = vcmp.lt.s32.totalorder %v455, 3
  %vm477 = vcmp.lt.s32.totalorder %v455, 4
  %v478 = vsel %vm474, %v458, %v461
  %v479 = vsel %vm477, %v467, 2102212464
  %v480 = vsel %vm476, %v464, %v479
  %v481 = vsel %vm475, %v478, %v480
  %v482 = vsel %vm474, %v461, %v464
  %v483 = vsel %vm477, %v470, 920167782
  %v484 = vsel %vm476, %v467, %v483
  %v485 = vsel %vm475, %v482, %v484
  %v486 = vsel %vm474, %v464, %v467
  %v487 = vsel %vm477, %v473, 1326507024
  %v488 = vsel %vm476, %v470, %v487
  %v489 = vsel %vm475, %v486, %v488
  %v490 = vshll.u32 %v450, 8
  %v491 = vmul.u32.u64.compose %v490, %v489
  %v492 = vextract.low.u32 %v491
  %v493 = vextract.high.u32 %v491
  %v494 = vmul.u32.u64.compose %v490, %v485
  %v495 = vextract.low.u32 %v494
  %v496 = vextract.high.u32 %v494
  %v497 = vmul.u32 %v490, %v481
  %v498 = vadd.s32 %v493, %v495
  %vm499 = vc.u32 %v493, %v495
  %v500 = vadd.s32 %v496, 1
  %v501 = vsel %vm499, %v500, %v496
  %v502 = vadd.s32 %v497, %v501
  %v503 = vadd.s32 %v502, 536870912
  %v504 = vshrl.u32 %v503, 30
  %v505 = vshll.u32 %v504, 30
  %v506 = vsub.s32 %v502, %v505
  %vm507 = vcmp.lt.s32.totalorder %v506, 0
  %v508 = vsub.s32 0, %v506
  %v509 = vsel %vm507, %v508, %v506
  %v510 = vclz %v509
  %v511 = vsub.s32 %v510, 2
  %vm512 = vcmp.gt.s32.totalorder 0, %v511
  %v513 = vsel %vm512, 0, %v511
  %v514 = vsub.s32 32, %v513
  %v515 = vshll.u32 %v506, %v513
  %v516 = vshrl.u32 %v498, %v514
  %v517 = vor.u32 %v515, %v516
  %v518 = vsub.s32 4294967266, %v513
  %v519 = vadd.s32 %v518, 127
  %v520 = vshll.u32 %v519, 23
  %v521 = vor.u32 4788187, %v520
  %v522 = vand.u32 2147483647, %v521
  %v524 = vcvt.s32.f32 %v517
  %v525 = vmul.f32 %v524, %v522
  %v526 = vxor.u32 %v525, 2147483648
  %v527 = vsel %vm444, %v526, %v525
  %v528 = vsub.s32 4, %v504
  %v529 = vsel %vm444, %v528, %v504
  %v530 = vsel %vm443, %v232, %v527
  %v531 = vsel %vm443, 0, %v529
  %v532 = vcosq.f32.pop %v530
  %v533 = vsinq.f32.pop %v530
  %vm534 = vweird.f32 %v232
  %v535 = vadd.s32 %v531, 3
  %v536 = vand.u32 %v535, 3
  %vm537 = vcmp.lt.s32.totalorder %v536, 2
  %vm538 = vcmp.eq.s32.totalorder %v536, 0
  %v539 = vxor.u32 %v533, 2147483648
  %v540 = vsel %vm538, %v532, %v539
  %vm541 = vcmp.eq.s32.totalorder %v536, 2
  %v542 = vxor.u32 %v532, 2147483648
  %v543 = vsel %vm541, %v542, %v533
  %v544 = vsel %vm537, %v540, %v543
  %v545 = vsel %vm534, nan, %v544
  %v546 = vand.u32 2147483647, %v233
  %vm547 = vcmp.le.f32.partialorder %v546, 0.7853982
  %vm548 = vcmp.lt.s32.totalorder %v233, 0
  %v549 = vand.u32 %v233, 2139095040
  %v550 = vshrl.u32 %v549, 23
  %v551 = vsub.s32 %v550, 127
  %v552 = vand.u32 2147483647, %v233
  %v553 = vand.u32 %v552, 8388607
  %v554 = vor.u32 %v553, 8388608
  %v555 = vsub.s32 0, %v554
  %v556 = vadd.s32 %v551, 1
  %vm557 = vcmp.gt.s32.totalorder %v556, 0
  %v558 = vsel %vm557, %v556, 0
  %v559 = vshrl.u32 %v558, 5
  %v560 = vand.u32 %v558, 31
  %v561 = vsub.s32 32, %v560
  %v562 = vshrl.u32 683565275, %v561
  %v563 = vshll.u32 683565275, %v560
  %v564 = vshrl.u32 2475754826, %v561
  %v565 = vor.u32 %v563, %v564
  %v566 = vshll.u32 2475754826, %v560
  %v567 = vshrl.u32 2131351028, %v561
  %v568 = vor.u32 %v566, %v567
  %v569 = vshll.u32 2131351028, %v560
  %v570 = vshrl.u32 2102212464, %v561
  %v571 = vor.u32 %v569, %v570
  %v572 = vshll.u32 2102212464, %v560
  %v573 = vshrl.u32 920167782, %v561
  %v574 = vor.u32 %v572, %v573
  %v575 = vshll.u32 920167782, %v560
  %v576 = vshrl.u32 1326507024, %v561
  %v577 = vor.u32 %v575, %v576
  %vm578 = vcmp.lt.s32.totalorder %v559, 1
  %vm579 = vcmp.lt.s32.totalorder %v559, 2
  %vm580 = vcmp.lt.s32.totalorder %v559, 3
  %vm581 = vcmp.lt.s32.totalorder %v559, 4
  %v582 = vsel %vm578, %v562, %v565
  %v583 = vsel %vm581, %v571, 2102212464
  %v584 = vsel %vm580, %v568, %v583
  %v585 = vsel %vm579, %v582, %v584
  %v586 = vsel %vm578, %v565, %v568
  %v587 = vsel %vm581, %v574, 920167782
  %v588 = vsel %vm580, %v571, %v587
  %v589 = vsel %vm579, %v586, %v588
  %v590 = vsel %vm578, %v568, %v571
  %v591 = vsel %vm581, %v577, 1326507024
  %v592 = vsel %vm580, %v574, %v591
  %v593 = vsel %vm579, %v590, %v592
  %v594 = vshll.u32 %v554, 8
  %v595 = vmul.u32.u64.compose %v594, %v593
  %v596 = vextract.low.u32 %v595
  %v597 = vextract.high.u32 %v595
  %v598 = vmul.u32.u64.compose %v594, %v589
  %v599 = vextract.low.u32 %v598
  %v600 = vextract.high.u32 %v598
  %v601 = vmul.u32 %v594, %v585
  %v602 = vadd.s32 %v597, %v599
  %vm603 = vc.u32 %v597, %v599
  %v604 = vadd.s32 %v600, 1
  %v605 = vsel %vm603, %v604, %v600
  %v606 = vadd.s32 %v601, %v605
  %v607 = vadd.s32 %v606, 536870912
  %v608 = vshrl.u32 %v607, 30
  %v609 = vshll.u32 %v608, 30
  %v610 = vsub.s32 %v606, %v609
  %vm611 = vcmp.lt.s32.totalorder %v610, 0
  %v612 = vsub.s32 0, %v610
  %v613 = vsel %vm611, %v612, %v610
  %v614 = vclz %v613
  %v615 = vsub.s32 %v614, 2
  %vm616 = vcmp.gt.s32.totalorder 0, %v615
  %v617 = vsel %vm616, 0, %v615
  %v618 = vsub.s32 32, %v617
  %v619 = vshll.u32 %v610, %v617
  %v620 = vshrl.u32 %v602, %v618
  %v621 = vor.u32 %v619, %v620
  %v622 = vsub.s32 4294967266, %v617
  %v623 = vadd.s32 %v622, 127
  %v624 = vshll.u32 %v623, 23
  %v625 = vor.u32 4788187, %v624
  %v626 = vand.u32 2147483647, %v625
  %v628 = vcvt.s32.f32 %v621
  %v629 = vmul.f32 %v628, %v626
  %v630 = vxor.u32 %v629, 2147483648
  %v631 = vsel %vm548, %v630, %v629
  %v632 = vsub.s32 4, %v608
  %v633 = vsel %vm548, %v632, %v608
  %v634 = vsel %vm547, %v233, %v631
  %v635 = vsel %vm547, 0, %v633
  %v636 = vcosq.f32.pop %v634
  %v637 = vsinq.f32.pop %v634
  %vm638 = vweird.f32 %v233
  %v639 = vadd.s32 %v635, 3
  %v640 = vand.u32 %v639, 3
  %vm641 = vcmp.lt.s32.totalorder %v640, 2
  %vm642 = vcmp.eq.s32.totalorder %v640, 0
  %v643 = vxor.u32 %v637, 2147483648
  %v644 = vsel %vm642, %v636, %v643
  %vm645 = vcmp.eq.s32.totalorder %v640, 2
  %v646 = vxor.u32 %v636, 2147483648
  %v647 = vsel %vm645, %v646, %v637
  %v648 = vsel %vm641, %v644, %v647
  %v649 = vsel %vm638, nan, %v648
  %v650 = vmul.f32 %v87, %v337
  %v651 = vmul.f32 %v93, %v441
  %v652 = vmul.f32 %v99, %v545
  %v653 = vmul.f32 %v105, %v649
  %v654 = vsel %vm69, %v650, 0.0
  %655 = vadd.xlane.f32.xlu0 %v654
  %v656 = vpop.xlane.xlu0 %655
  %v657 = vsel %vm69, %v651, 0.0
  %658 = vadd.xlane.f32.xlu0 %v657
  %v659 = vpop.xlane.xlu0 %658
  %v660 = vsel %vm69, %v652, 0.0
  %661 = vadd.xlane.f32.xlu0 %v660
  %v662 = vpop.xlane.xlu0 %661
  %v663 = vsel %vm69, %v653, 0.0
  %664 = vadd.xlane.f32.xlu0 %v663
  %v665 = vpop.xlane.xlu0 %664
  %v666 = vand.u32 2147483647, %v230
  %vm667 = vcmp.le.f32.partialorder %v666, 0.7853982
  %vm668 = vcmp.lt.s32.totalorder %v230, 0
  %v669 = vand.u32 %v230, 2139095040
  %v670 = vshrl.u32 %v669, 23
  %v671 = vsub.s32 %v670, 127
  %v672 = vand.u32 2147483647, %v230
  %v673 = vand.u32 %v672, 8388607
  %v674 = vor.u32 %v673, 8388608
  %v675 = vsub.s32 0, %v674
  %v676 = vadd.s32 %v671, 1
  %vm677 = vcmp.gt.s32.totalorder %v676, 0
  %v678 = vsel %vm677, %v676, 0
  %v679 = vshrl.u32 %v678, 5
  %v680 = vand.u32 %v678, 31
  %v681 = vsub.s32 32, %v680
  %v682 = vshrl.u32 683565275, %v681
  %v683 = vshll.u32 683565275, %v680
  %v684 = vshrl.u32 2475754826, %v681
  %v685 = vor.u32 %v683, %v684
  %v686 = vshll.u32 2475754826, %v680
  %v687 = vshrl.u32 2131351028, %v681
  %v688 = vor.u32 %v686, %v687
  %v689 = vshll.u32 2131351028, %v680
  %v690 = vshrl.u32 2102212464, %v681
  %v691 = vor.u32 %v689, %v690
  %v692 = vshll.u32 2102212464, %v680
  %v693 = vshrl.u32 920167782, %v681
  %v694 = vor.u32 %v692, %v693
  %v695 = vshll.u32 920167782, %v680
  %v696 = vshrl.u32 1326507024, %v681
  %v697 = vor.u32 %v695, %v696
  %vm698 = vcmp.lt.s32.totalorder %v679, 1
  %vm699 = vcmp.lt.s32.totalorder %v679, 2
  %vm700 = vcmp.lt.s32.totalorder %v679, 3
  %vm701 = vcmp.lt.s32.totalorder %v679, 4
  %v702 = vsel %vm698, %v682, %v685
  %v703 = vsel %vm701, %v691, 2102212464
  %v704 = vsel %vm700, %v688, %v703
  %v705 = vsel %vm699, %v702, %v704
  %v706 = vsel %vm698, %v685, %v688
  %v707 = vsel %vm701, %v694, 920167782
  %v708 = vsel %vm700, %v691, %v707
  %v709 = vsel %vm699, %v706, %v708
  %v710 = vsel %vm698, %v688, %v691
  %v711 = vsel %vm701, %v697, 1326507024
  %v712 = vsel %vm700, %v694, %v711
  %v713 = vsel %vm699, %v710, %v712
  %v714 = vshll.u32 %v674, 8
  %v715 = vmul.u32.u64.compose %v714, %v713
  %v716 = vextract.low.u32 %v715
  %v717 = vextract.high.u32 %v715
  %v718 = vmul.u32.u64.compose %v714, %v709
  %v719 = vextract.low.u32 %v718
  %v720 = vextract.high.u32 %v718
  %v721 = vmul.u32 %v714, %v705
  %v722 = vadd.s32 %v717, %v719
  %vm723 = vc.u32 %v717, %v719
  %v724 = vadd.s32 %v720, 1
  %v725 = vsel %vm723, %v724, %v720
  %v726 = vadd.s32 %v721, %v725
  %v727 = vadd.s32 %v726, 536870912
  %v728 = vshrl.u32 %v727, 30
  %v729 = vshll.u32 %v728, 30
  %v730 = vsub.s32 %v726, %v729
  %vm731 = vcmp.lt.s32.totalorder %v730, 0
  %v732 = vsub.s32 0, %v730
  %v733 = vsel %vm731, %v732, %v730
  %v734 = vclz %v733
  %v735 = vsub.s32 %v734, 2
  %vm736 = vcmp.gt.s32.totalorder 0, %v735
  %v737 = vsel %vm736, 0, %v735
  %v738 = vsub.s32 32, %v737
  %v739 = vshll.u32 %v730, %v737
  %v740 = vshrl.u32 %v722, %v738
  %v741 = vor.u32 %v739, %v740
  %v742 = vsub.s32 4294967266, %v737
  %v743 = vadd.s32 %v742, 127
  %v744 = vshll.u32 %v743, 23
  %v745 = vor.u32 4788187, %v744
  %v746 = vand.u32 2147483647, %v745
  %v748 = vcvt.s32.f32 %v741
  %v749 = vmul.f32 %v748, %v746
  %v750 = vxor.u32 %v749, 2147483648
  %v751 = vsel %vm668, %v750, %v749
  %v752 = vsub.s32 4, %v728
  %v753 = vsel %vm668, %v752, %v728
  %v754 = vsel %vm667, %v230, %v751
  %v755 = vsel %vm667, 0, %v753
  %v756 = vcosq.f32.pop %v754
  %v757 = vsinq.f32.pop %v754
  %vm758 = vweird.f32 %v230
  %v759 = vand.u32 %v755, 3
  %vm760 = vcmp.lt.s32.totalorder %v759, 2
  %vm761 = vcmp.eq.s32.totalorder %v759, 0
  %v762 = vxor.u32 %v757, 2147483648
  %v763 = vsel %vm761, %v756, %v762
  %vm764 = vcmp.eq.s32.totalorder %v759, 2
  %v765 = vxor.u32 %v756, 2147483648
  %v766 = vsel %vm764, %v765, %v757
  %v767 = vsel %vm760, %v763, %v766
  %v768 = vsel %vm758, nan, %v767
  %v769 = vand.u32 2147483647, %v231
  %vm770 = vcmp.le.f32.partialorder %v769, 0.7853982
  %vm771 = vcmp.lt.s32.totalorder %v231, 0
  %v772 = vand.u32 %v231, 2139095040
  %v773 = vshrl.u32 %v772, 23
  %v774 = vsub.s32 %v773, 127
  %v775 = vand.u32 2147483647, %v231
  %v776 = vand.u32 %v775, 8388607
  %v777 = vor.u32 %v776, 8388608
  %v778 = vsub.s32 0, %v777
  %v779 = vadd.s32 %v774, 1
  %vm780 = vcmp.gt.s32.totalorder %v779, 0
  %v781 = vsel %vm780, %v779, 0
  %v782 = vshrl.u32 %v781, 5
  %v783 = vand.u32 %v781, 31
  %v784 = vsub.s32 32, %v783
  %v785 = vshrl.u32 683565275, %v784
  %v786 = vshll.u32 683565275, %v783
  %v787 = vshrl.u32 2475754826, %v784
  %v788 = vor.u32 %v786, %v787
  %v789 = vshll.u32 2475754826, %v783
  %v790 = vshrl.u32 2131351028, %v784
  %v791 = vor.u32 %v789, %v790
  %v792 = vshll.u32 2131351028, %v783
  %v793 = vshrl.u32 2102212464, %v784
  %v794 = vor.u32 %v792, %v793
  %v795 = vshll.u32 2102212464, %v783
  %v796 = vshrl.u32 920167782, %v784
  %v797 = vor.u32 %v795, %v796
  %v798 = vshll.u32 920167782, %v783
  %v799 = vshrl.u32 1326507024, %v784
  %v800 = vor.u32 %v798, %v799
  %vm801 = vcmp.lt.s32.totalorder %v782, 1
  %vm802 = vcmp.lt.s32.totalorder %v782, 2
  %vm803 = vcmp.lt.s32.totalorder %v782, 3
  %vm804 = vcmp.lt.s32.totalorder %v782, 4
  %v805 = vsel %vm801, %v785, %v788
  %v806 = vsel %vm804, %v794, 2102212464
  %v807 = vsel %vm803, %v791, %v806
  %v808 = vsel %vm802, %v805, %v807
  %v809 = vsel %vm801, %v788, %v791
  %v810 = vsel %vm804, %v797, 920167782
  %v811 = vsel %vm803, %v794, %v810
  %v812 = vsel %vm802, %v809, %v811
  %v813 = vsel %vm801, %v791, %v794
  %v814 = vsel %vm804, %v800, 1326507024
  %v815 = vsel %vm803, %v797, %v814
  %v816 = vsel %vm802, %v813, %v815
  %v817 = vshll.u32 %v777, 8
  %v818 = vmul.u32.u64.compose %v817, %v816
  %v819 = vextract.low.u32 %v818
  %v820 = vextract.high.u32 %v818
  %v821 = vmul.u32.u64.compose %v817, %v812
  %v822 = vextract.low.u32 %v821
  %v823 = vextract.high.u32 %v821
  %v824 = vmul.u32 %v817, %v808
  %v825 = vadd.s32 %v820, %v822
  %vm826 = vc.u32 %v820, %v822
  %v827 = vadd.s32 %v823, 1
  %v828 = vsel %vm826, %v827, %v823
  %v829 = vadd.s32 %v824, %v828
  %v830 = vadd.s32 %v829, 536870912
  %v831 = vshrl.u32 %v830, 30
  %v832 = vshll.u32 %v831, 30
  %v833 = vsub.s32 %v829, %v832
  %vm834 = vcmp.lt.s32.totalorder %v833, 0
  %v835 = vsub.s32 0, %v833
  %v836 = vsel %vm834, %v835, %v833
  %v837 = vclz %v836
  %v838 = vsub.s32 %v837, 2
  %vm839 = vcmp.gt.s32.totalorder 0, %v838
  %v840 = vsel %vm839, 0, %v838
  %v841 = vsub.s32 32, %v840
  %v842 = vshll.u32 %v833, %v840
  %v843 = vshrl.u32 %v825, %v841
  %v844 = vor.u32 %v842, %v843
  %v845 = vsub.s32 4294967266, %v840
  %v846 = vadd.s32 %v845, 127
  %v847 = vshll.u32 %v846, 23
  %v848 = vor.u32 4788187, %v847
  %v849 = vand.u32 2147483647, %v848
  %v851 = vcvt.s32.f32 %v844
  %v852 = vmul.f32 %v851, %v849
  %v853 = vxor.u32 %v852, 2147483648
  %v854 = vsel %vm771, %v853, %v852
  %v855 = vsub.s32 4, %v831
  %v856 = vsel %vm771, %v855, %v831
  %v857 = vsel %vm770, %v231, %v854
  %v858 = vsel %vm770, 0, %v856
  %v859 = vcosq.f32.pop %v857
  %v860 = vsinq.f32.pop %v857
  %vm861 = vweird.f32 %v231
  %v862 = vand.u32 %v858, 3
  %vm863 = vcmp.lt.s32.totalorder %v862, 2
  %vm864 = vcmp.eq.s32.totalorder %v862, 0
  %v865 = vxor.u32 %v860, 2147483648
  %v866 = vsel %vm864, %v859, %v865
  %vm867 = vcmp.eq.s32.totalorder %v862, 2
  %v868 = vxor.u32 %v859, 2147483648
  %v869 = vsel %vm867, %v868, %v860
  %v870 = vsel %vm863, %v866, %v869
  %v871 = vsel %vm861, nan, %v870
  %v872 = vand.u32 2147483647, %v232
  %vm873 = vcmp.le.f32.partialorder %v872, 0.7853982
  %vm874 = vcmp.lt.s32.totalorder %v232, 0
  %v875 = vand.u32 %v232, 2139095040
  %v876 = vshrl.u32 %v875, 23
  %v877 = vsub.s32 %v876, 127
  %v878 = vand.u32 2147483647, %v232
  %v879 = vand.u32 %v878, 8388607
  %v880 = vor.u32 %v879, 8388608
  %v881 = vsub.s32 0, %v880
  %v882 = vadd.s32 %v877, 1
  %vm883 = vcmp.gt.s32.totalorder %v882, 0
  %v884 = vsel %vm883, %v882, 0
  %v885 = vshrl.u32 %v884, 5
  %v886 = vand.u32 %v884, 31
  %v887 = vsub.s32 32, %v886
  %v888 = vshrl.u32 683565275, %v887
  %v889 = vshll.u32 683565275, %v886
  %v890 = vshrl.u32 2475754826, %v887
  %v891 = vor.u32 %v889, %v890
  %v892 = vshll.u32 2475754826, %v886
  %v893 = vshrl.u32 2131351028, %v887
  %v894 = vor.u32 %v892, %v893
  %v895 = vshll.u32 2131351028, %v886
  %v896 = vshrl.u32 2102212464, %v887
  %v897 = vor.u32 %v895, %v896
  %v898 = vshll.u32 2102212464, %v886
  %v899 = vshrl.u32 920167782, %v887
  %v900 = vor.u32 %v898, %v899
  %v901 = vshll.u32 920167782, %v886
  %v902 = vshrl.u32 1326507024, %v887
  %v903 = vor.u32 %v901, %v902
  %vm904 = vcmp.lt.s32.totalorder %v885, 1
  %vm905 = vcmp.lt.s32.totalorder %v885, 2
  %vm906 = vcmp.lt.s32.totalorder %v885, 3
  %vm907 = vcmp.lt.s32.totalorder %v885, 4
  %v908 = vsel %vm904, %v888, %v891
  %v909 = vsel %vm907, %v897, 2102212464
  %v910 = vsel %vm906, %v894, %v909
  %v911 = vsel %vm905, %v908, %v910
  %v912 = vsel %vm904, %v891, %v894
  %v913 = vsel %vm907, %v900, 920167782
  %v914 = vsel %vm906, %v897, %v913
  %v915 = vsel %vm905, %v912, %v914
  %v916 = vsel %vm904, %v894, %v897
  %v917 = vsel %vm907, %v903, 1326507024
  %v918 = vsel %vm906, %v900, %v917
  %v919 = vsel %vm905, %v916, %v918
  %v920 = vshll.u32 %v880, 8
  %v921 = vmul.u32.u64.compose %v920, %v919
  %v922 = vextract.low.u32 %v921
  %v923 = vextract.high.u32 %v921
  %v924 = vmul.u32.u64.compose %v920, %v915
  %v925 = vextract.low.u32 %v924
  %v926 = vextract.high.u32 %v924
  %v927 = vmul.u32 %v920, %v911
  %v928 = vadd.s32 %v923, %v925
  %vm929 = vc.u32 %v923, %v925
  %v930 = vadd.s32 %v926, 1
  %v931 = vsel %vm929, %v930, %v926
  %v932 = vadd.s32 %v927, %v931
  %v933 = vadd.s32 %v932, 536870912
  %v934 = vshrl.u32 %v933, 30
  %v935 = vshll.u32 %v934, 30
  %v936 = vsub.s32 %v932, %v935
  %vm937 = vcmp.lt.s32.totalorder %v936, 0
  %v938 = vsub.s32 0, %v936
  %v939 = vsel %vm937, %v938, %v936
  %v940 = vclz %v939
  %v941 = vsub.s32 %v940, 2
  %vm942 = vcmp.gt.s32.totalorder 0, %v941
  %v943 = vsel %vm942, 0, %v941
  %v944 = vsub.s32 32, %v943
  %v945 = vshll.u32 %v936, %v943
  %v946 = vshrl.u32 %v928, %v944
  %v947 = vor.u32 %v945, %v946
  %v948 = vsub.s32 4294967266, %v943
  %v949 = vadd.s32 %v948, 127
  %v950 = vshll.u32 %v949, 23
  %v951 = vor.u32 4788187, %v950
  %v952 = vand.u32 2147483647, %v951
  %v954 = vcvt.s32.f32 %v947
  %v955 = vmul.f32 %v954, %v952
  %v956 = vxor.u32 %v955, 2147483648
  %v957 = vsel %vm874, %v956, %v955
  %v958 = vsub.s32 4, %v934
  %v959 = vsel %vm874, %v958, %v934
  %v960 = vsel %vm873, %v232, %v957
  %v961 = vsel %vm873, 0, %v959
  %v962 = vcosq.f32.pop %v960
  %v963 = vsinq.f32.pop %v960
  %vm964 = vweird.f32 %v232
  %v965 = vand.u32 %v961, 3
  %vm966 = vcmp.lt.s32.totalorder %v965, 2
  %vm967 = vcmp.eq.s32.totalorder %v965, 0
  %v968 = vxor.u32 %v963, 2147483648
  %v969 = vsel %vm967, %v962, %v968
  %vm970 = vcmp.eq.s32.totalorder %v965, 2
  %v971 = vxor.u32 %v962, 2147483648
  %v972 = vsel %vm970, %v971, %v963
  %v973 = vsel %vm966, %v969, %v972
  %v974 = vsel %vm964, nan, %v973
  %v975 = vand.u32 2147483647, %v233
  %vm976 = vcmp.le.f32.partialorder %v975, 0.7853982
  %vm977 = vcmp.lt.s32.totalorder %v233, 0
  %v978 = vand.u32 %v233, 2139095040
  %v979 = vshrl.u32 %v978, 23
  %v980 = vsub.s32 %v979, 127
  %v981 = vand.u32 2147483647, %v233
  %v982 = vand.u32 %v981, 8388607
  %v983 = vor.u32 %v982, 8388608
  %v984 = vsub.s32 0, %v983
  %v985 = vadd.s32 %v980, 1
  %vm986 = vcmp.gt.s32.totalorder %v985, 0
  %v987 = vsel %vm986, %v985, 0
  %v988 = vshrl.u32 %v987, 5
  %v989 = vand.u32 %v987, 31
  %v990 = vsub.s32 32, %v989
  %v991 = vshrl.u32 683565275, %v990
  %v992 = vshll.u32 683565275, %v989
  %v993 = vshrl.u32 2475754826, %v990
  %v994 = vor.u32 %v992, %v993
  %v995 = vshll.u32 2475754826, %v989
  %v996 = vshrl.u32 2131351028, %v990
  %v997 = vor.u32 %v995, %v996
  %v998 = vshll.u32 2131351028, %v989
  %v999 = vshrl.u32 2102212464, %v990
  %v1000 = vor.u32 %v998, %v999
  %v1001 = vshll.u32 2102212464, %v989
  %v1002 = vshrl.u32 920167782, %v990
  %v1003 = vor.u32 %v1001, %v1002
  %v1004 = vshll.u32 920167782, %v989
  %v1005 = vshrl.u32 1326507024, %v990
  %v1006 = vor.u32 %v1004, %v1005
  %vm1007 = vcmp.lt.s32.totalorder %v988, 1
  %vm1008 = vcmp.lt.s32.totalorder %v988, 2
  %vm1009 = vcmp.lt.s32.totalorder %v988, 3
  %vm1010 = vcmp.lt.s32.totalorder %v988, 4
  %v1011 = vsel %vm1007, %v991, %v994
  %v1012 = vsel %vm1010, %v1000, 2102212464
  %v1013 = vsel %vm1009, %v997, %v1012
  %v1014 = vsel %vm1008, %v1011, %v1013
  %v1015 = vsel %vm1007, %v994, %v997
  %v1016 = vsel %vm1010, %v1003, 920167782
  %v1017 = vsel %vm1009, %v1000, %v1016
  %v1018 = vsel %vm1008, %v1015, %v1017
  %v1019 = vsel %vm1007, %v997, %v1000
  %v1020 = vsel %vm1010, %v1006, 1326507024
  %v1021 = vsel %vm1009, %v1003, %v1020
  %v1022 = vsel %vm1008, %v1019, %v1021
  %v1023 = vshll.u32 %v983, 8
  %v1024 = vmul.u32.u64.compose %v1023, %v1022
  %v1025 = vextract.low.u32 %v1024
  %v1026 = vextract.high.u32 %v1024
  %v1027 = vmul.u32.u64.compose %v1023, %v1018
  %v1028 = vextract.low.u32 %v1027
  %v1029 = vextract.high.u32 %v1027
  %v1030 = vmul.u32 %v1023, %v1014
  %v1031 = vadd.s32 %v1026, %v1028
  %vm1032 = vc.u32 %v1026, %v1028
  %v1033 = vadd.s32 %v1029, 1
  %v1034 = vsel %vm1032, %v1033, %v1029
  %v1035 = vadd.s32 %v1030, %v1034
  %v1036 = vadd.s32 %v1035, 536870912
  %v1037 = vshrl.u32 %v1036, 30
  %v1038 = vshll.u32 %v1037, 30
  %v1039 = vsub.s32 %v1035, %v1038
  %vm1040 = vcmp.lt.s32.totalorder %v1039, 0
  %v1041 = vsub.s32 0, %v1039
  %v1042 = vsel %vm1040, %v1041, %v1039
  %v1043 = vclz %v1042
  %v1044 = vsub.s32 %v1043, 2
  %vm1045 = vcmp.gt.s32.totalorder 0, %v1044
  %v1046 = vsel %vm1045, 0, %v1044
  %v1047 = vsub.s32 32, %v1046
  %v1048 = vshll.u32 %v1039, %v1046
  %v1049 = vshrl.u32 %v1031, %v1047
  %v1050 = vor.u32 %v1048, %v1049
  %v1051 = vsub.s32 4294967266, %v1046
  %v1052 = vadd.s32 %v1051, 127
  %v1053 = vshll.u32 %v1052, 23
  %v1054 = vor.u32 4788187, %v1053
  %v1055 = vand.u32 2147483647, %v1054
  %v1057 = vcvt.s32.f32 %v1050
  %v1058 = vmul.f32 %v1057, %v1055
  %v1059 = vxor.u32 %v1058, 2147483648
  %v1060 = vsel %vm977, %v1059, %v1058
  %v1061 = vsub.s32 4, %v1037
  %v1062 = vsel %vm977, %v1061, %v1037
  %v1063 = vsel %vm976, %v233, %v1060
  %v1064 = vsel %vm976, 0, %v1062
  %v1065 = vcosq.f32.pop %v1063
  %v1066 = vsinq.f32.pop %v1063
  %vm1067 = vweird.f32 %v233
  %v1068 = vand.u32 %v1064, 3
  %vm1069 = vcmp.lt.s32.totalorder %v1068, 2
  %vm1070 = vcmp.eq.s32.totalorder %v1068, 0
  %v1071 = vxor.u32 %v1066, 2147483648
  %v1072 = vsel %vm1070, %v1065, %v1071
  %vm1073 = vcmp.eq.s32.totalorder %v1068, 2
  %v1074 = vxor.u32 %v1065, 2147483648
  %v1075 = vsel %vm1073, %v1074, %v1066
  %v1076 = vsel %vm1069, %v1072, %v1075
  %v1077 = vsel %vm1067, nan, %v1076
  %v1078 = vmul.f32 %v87, %v768
  %v1079 = vmul.f32 %v93, %v871
  %v1080 = vmul.f32 %v99, %v974
  %v1081 = vmul.f32 %v105, %v1077
  %v1082 = vsel %vm69, %v1078, 0.0
  %1083 = vadd.xlane.f32.xlu0 %v1082
  %v1084 = vpop.xlane.xlu0 %1083
  %v1085 = vsel %vm69, %v1079, 0.0
  %1086 = vadd.xlane.f32.xlu0 %v1085
  %v1087 = vpop.xlane.xlu0 %1086
  %v1088 = vsel %vm69, %v1080, 0.0
  %1089 = vadd.xlane.f32.xlu0 %v1088
  %v1090 = vpop.xlane.xlu0 %1089
  %v1091 = vsel %vm69, %v1081, 0.0
  %1092 = vadd.xlane.f32.xlu0 %v1091
  %v1093 = vpop.xlane.xlu0 %1092
  %v1098 = vlaneseq
  %v1099 = vshrl.u32 %v1098, 7
  %v1100 = vsub.s32 %v111, %v1099
  %v1101 = vrot.slane %v656, %v1100
  %v1102 = vlaneseq
  %v1103 = vshrl.u32 %v1102, 7
  %v1104 = vsub.s32 %v111, %v1103
  %v1105 = vrot.slane %v659, %v1104
  %v1106 = vlaneseq
  %v1107 = vshrl.u32 %v1106, 7
  %v1108 = vsub.s32 %v111, %v1107
  %v1109 = vrot.slane %v662, %v1108
  %v1110 = vlaneseq
  %v1111 = vshrl.u32 %v1110, 7
  %v1112 = vsub.s32 %v111, %v1111
  %v1113 = vrot.slane %v665, %v1112
  %v1114 = vsel %vm128, %v1105, %v1101
  %v1115 = vsel %vm130, %v1109, %v1114
  %v1116 = vsel %vm132, %v1113, %v1115
  %v1122 = vadd.s32 %v111, 4294967288
  %v1123 = vlaneseq
  %v1124 = vshrl.u32 %v1123, 7
  %v1125 = vsub.s32 %v1122, %v1124
  %v1126 = vrot.slane %v1084, %v1125
  %v1127 = vlaneseq
  %v1128 = vshrl.u32 %v1127, 7
  %v1129 = vsub.s32 %v1122, %v1128
  %v1130 = vrot.slane %v1087, %v1129
  %v1131 = vlaneseq
  %v1132 = vshrl.u32 %v1131, 7
  %v1133 = vsub.s32 %v1122, %v1132
  %v1134 = vrot.slane %v1090, %v1133
  %v1135 = vlaneseq
  %v1136 = vshrl.u32 %v1135, 7
  %v1137 = vsub.s32 %v1122, %v1136
  %v1138 = vrot.slane %v1093, %v1137
  %v1139 = vsel %vm128, %v1130, %v1126
  %v1140 = vsel %vm130, %v1134, %v1139
  %v1141 = vsel %vm132, %v1138, %v1140
  %vm1143 = vcmask 64512
  %v1144 = vsel %vm1143, %v1116, %v1141
  %v1145 = vld [vmem:[%s4] sm:$0xff]
  %v1146 = vld [vmem:[%s4 + $0x8] sm:$0xff]
  %v1147 = vld [vmem:[%s5] sm:$0xff]
  %v1148 = vsel %vm1143, %v133, 0
  %1150 = vmatprep.subr.mxu0 0.0
  %1151 = vmatpush1.msra.mxu0 0.0
  %1152 = vmatprep.subr.mxu0 0.0
  %1153 = vmatpush1.msra.mxu0 0.0
  %1154 = vmatprep.subr.mxu0 0.0
  %1155 = vmatpush1.msra.mxu0 0.0
  %1156 = vmatprep.subr.mxu0 0.0
  %1157 = vmatpush1.msra.mxu0 0.0
  %1158 = vmatprep.subr.mxu0 0.0
  %1159 = vmatpush1.msra.mxu0 0.0
  %1160 = vmatprep.subr.mxu0 0.0
  %1161 = vmatpush1.msra.mxu0 0.0
  %1162 = vmatprep.subr.mxu0 0.0
  %1163 = vmatpush1.msra.mxu0 0.0
  %1164 = vmatprep.subr.mxu0 0.0
  %1165 = vmatpush1.msra.mxu0 0.0
  %1166 = vmatprep.subr.mxu0 0.0
  %1167 = vmatpush1.msra.mxu0 0.0
  %1168 = vmatprep.subr.mxu0 0.0
  %1169 = vmatpush1.msra.mxu0 0.0
  %1170 = vmatprep.subr.mxu0 0.0
  %1171 = vmatpush1.msra.mxu0 0.0
  %1172 = vmatprep.subr.mxu0 0.0
  %1173 = vmatpush1.msra.mxu0 0.0
  %1174 = vmatprep.subr.mxu0 0.0
  %1175 = vmatpush1.msra.mxu0 0.0
  %1176 = vmatprep.subr.mxu0 0.0
  %1177 = vmatpush1.msra.mxu0 0.0
  %1178 = vmatprep.subr.mxu0 0.0
  %1179 = vmatpush1.msra.mxu0 0.0
  %1180 = vmatprep.subr.mxu0 0.0
  %1181 = vmatpush1.msra.mxu0 %v1147
  %1182 = vmatprep.subr.mxu0 0.0
  %1183 = vmatpush2.msra.mxu0 0.0
  %1184 = vmatprep.subr.mxu0 0.0
  %1185 = vmatpush2.msra.mxu0 0.0
  %1186 = vmatprep.subr.mxu0 0.0
  %1187 = vmatpush2.msra.mxu0 0.0
  %1188 = vmatprep.subr.mxu0 0.0
  %1189 = vmatpush2.msra.mxu0 0.0
  %1190 = vmatprep.subr.mxu0 0.0
  %1191 = vmatpush2.msra.mxu0 0.0
  %1192 = vmatprep.subr.mxu0 0.0
  %1193 = vmatpush2.msra.mxu0 0.0
  %1194 = vmatprep.subr.mxu0 0.0
  %1195 = vmatpush2.msra.mxu0 0.0
  %1196 = vmatprep.subr.mxu0 0.0
  %1197 = vmatpush2.msra.mxu0 0.0
  %1198 = vmatprep.subr.mxu0 0.0
  %1199 = vmatpush2.msra.mxu0 0.0
  %1200 = vmatprep.subr.mxu0 0.0
  %1201 = vmatpush2.msra.mxu0 0.0
  %1202 = vmatprep.subr.mxu0 0.0
  %1203 = vmatpush2.msra.mxu0 0.0
  %1204 = vmatprep.subr.mxu0 0.0
  %1205 = vmatpush2.msra.mxu0 0.0
  %1206 = vmatprep.subr.mxu0 0.0
  %1207 = vmatpush2.msra.mxu0 0.0
  %1208 = vmatprep.subr.mxu0 0.0
  %1209 = vmatpush2.msra.mxu0 0.0
  %1210 = vmatprep.subr.mxu0 0.0
  %1211 = vmatpush2.msra.mxu0 0.0
  %1212 = vmatprep.subr.mxu0 0.0
  %1213 = vmatpush2.msra.mxu0 0.0
  %1214 = vmatprep.mubr.f32.mxu0 0.0
  %1215 = vmatmul.mubr.f32.gmra.mxu0 %v1148
  %v1216 = vpop.f32.mrf.mxu0
  %v1217 = vadd.f32 0.0, %v1216
  %v1218 = vpop.f32.mrf.mxu0
  %1219 = vdwg.mxu0
  %v1221 = vsel %vm69, %v1144, 0
  %1223 = vmatprep.subr.mxu0 0.0
  %1224 = vmatpush1.msra.mxu0 0.0
  %1225 = vmatprep.subr.mxu0 0.0
  %1226 = vmatpush1.msra.mxu0 0.0
  %1227 = vmatprep.subr.mxu0 0.0
  %1228 = vmatpush1.msra.mxu0 0.0
  %1229 = vmatprep.subr.mxu0 0.0
  %1230 = vmatpush1.msra.mxu0 0.0
  %1231 = vmatprep.subr.mxu0 0.0
  %1232 = vmatpush1.msra.mxu0 0.0
  %1233 = vmatprep.subr.mxu0 0.0
  %1234 = vmatpush1.msra.mxu0 0.0
  %1235 = vmatprep.subr.mxu0 0.0
  %1236 = vmatpush1.msra.mxu0 0.0
  %1237 = vmatprep.subr.mxu0 0.0
  %1238 = vmatpush1.msra.mxu0 0.0
  %1239 = vmatprep.subr.mxu0 0.0
  %1240 = vmatpush1.msra.mxu0 0.0
  %1241 = vmatprep.subr.mxu0 0.0
  %1242 = vmatpush1.msra.mxu0 0.0
  %1243 = vmatprep.subr.mxu0 0.0
  %1244 = vmatpush1.msra.mxu0 0.0
  %1245 = vmatprep.subr.mxu0 0.0
  %1246 = vmatpush1.msra.mxu0 0.0
  %1247 = vmatprep.subr.mxu0 0.0
  %1248 = vmatpush1.msra.mxu0 0.0
  %1249 = vmatprep.subr.mxu0 0.0
  %1250 = vmatpush1.msra.mxu0 0.0
  %1251 = vmatprep.subr.mxu0 0.0
  %1252 = vmatpush1.msra.mxu0 %v1146
  %1253 = vmatprep.subr.mxu0 0.0
  %1254 = vmatpush1.msra.mxu0 %v1145
  %1255 = vmatprep.subr.mxu0 0.0
  %1256 = vmatpush2.msra.mxu0 0.0
  %1257 = vmatprep.subr.mxu0 0.0
  %1258 = vmatpush2.msra.mxu0 0.0
  %1259 = vmatprep.subr.mxu0 0.0
  %1260 = vmatpush2.msra.mxu0 0.0
  %1261 = vmatprep.subr.mxu0 0.0
  %1262 = vmatpush2.msra.mxu0 0.0
  %1263 = vmatprep.subr.mxu0 0.0
  %1264 = vmatpush2.msra.mxu0 0.0
  %1265 = vmatprep.subr.mxu0 0.0
  %1266 = vmatpush2.msra.mxu0 0.0
  %1267 = vmatprep.subr.mxu0 0.0
  %1268 = vmatpush2.msra.mxu0 0.0
  %1269 = vmatprep.subr.mxu0 0.0
  %1270 = vmatpush2.msra.mxu0 0.0
  %1271 = vmatprep.subr.mxu0 0.0
  %1272 = vmatpush2.msra.mxu0 0.0
  %1273 = vmatprep.subr.mxu0 0.0
  %1274 = vmatpush2.msra.mxu0 0.0
  %1275 = vmatprep.subr.mxu0 0.0
  %1276 = vmatpush2.msra.mxu0 0.0
  %1277 = vmatprep.subr.mxu0 0.0
  %1278 = vmatpush2.msra.mxu0 0.0
  %1279 = vmatprep.subr.mxu0 0.0
  %1280 = vmatpush2.msra.mxu0 0.0
  %1281 = vmatprep.subr.mxu0 0.0
  %1282 = vmatpush2.msra.mxu0 0.0
  %1283 = vmatprep.subr.mxu0 0.0
  %1284 = vmatpush2.msra.mxu0 0.0
  %1285 = vmatprep.subr.mxu0 0.0
  %1286 = vmatpush2.msra.mxu0 0.0
  %1287 = vmatprep.mubr.f32.mxu0 0.0
  %1288 = vmatmul.mubr.f32.gmra.mxu0 %v1221
  %v1289 = vpop.f32.mrf.mxu0
  %v1290 = vadd.f32 %v1217, %v1289
  %v1291 = vpop.f32.mrf.mxu0
  %1292 = vdwg.mxu0
  %v1293 = vld [vmem:[%s6] sm:$0x1]
  %v1295 = vlaneseq
  %v1296 = vshrl.u32 %v1295, 7
  %v1297 = vsub.s32 0, %v1296
  %v1298 = vrot.slane %v1293, %v1297
  %v1300 = vmul.f32 %v177, %v1298
  %v1301 = vadd.f32 %v1290, %v1300
  %v1302 = vld [vmem:[%s7] sm:$0x1]
  %v1304 = vlaneseq
  %v1305 = vshrl.u32 %v1304, 7
  %v1306 = vsub.s32 0, %v1305
  %v1307 = vrot.slane %v1302, %v1306
  %v1309 = vmul.f32 %v138, %v1307
  %v1310 = vadd.f32 %v1301, %v1309
  %vm1311 = vcmp.gt.f32.partialorder %v138, 0.0
  %v1312 = vmax.f32 %v138, 1.0
  %v1313 = vrcp.pop %v1312
  %v1314 = vmul.f32 1.0, %v1313
  %v1315 = vsel %vm1311, %v1314, 0.0
  %v1316 = vmul.f32 %v1310, %v1315
  %v1317 = vld [vmem:[%s8] sm:$0x1]
  %v1319 = vlaneseq
  %v1320 = vshrl.u32 %v1319, 7
  %v1321 = vsub.s32 0, %v1320
  %v1322 = vrot.slane %v1317, %v1321
  %v1324 = vadd.f32 %v1316, %v1322
  %v1325 = vld [vmem:[%s2] sm:$0xf]
  %v1326 = vld [vmem:[%s9] sm:$0x3f]
  %v1327 = vld [vmem:[%s10] sm:$0x1]
  %v1329 = vlaneseq
  %v1330 = vshrl.u32 %v1329, 7
  %v1331 = vsub.s32 0, %v1330
  %v1332 = vrot.slane %v1327, %v1331
  %vm1334 = vcmask 48128
  %v1336 = vsel %vm1334, %v1325, 0
  %vm1338 = vcmask 1045504
  %v1340 = vsel %vm1338, %v1326, 0
  %1342 = vmatprep.subr.mxu0 0.0
  %1343 = vmatpush1.msra.mxu0 0.0
  %1344 = vmatprep.subr.mxu0 0.0
  %1345 = vmatpush1.msra.mxu0 0.0
  %1346 = vmatprep.subr.mxu0 0.0
  %1347 = vmatpush1.msra.mxu0 0.0
  %1348 = vmatprep.subr.mxu0 0.0
  %1349 = vmatpush1.msra.mxu0 0.0
  %1350 = vmatprep.subr.mxu0 0.0
  %1351 = vmatpush1.msra.mxu0 0.0
  %1352 = vmatprep.subr.mxu0 0.0
  %1353 = vmatpush1.msra.mxu0 0.0
  %1354 = vmatprep.subr.mxu0 0.0
  %1355 = vmatpush1.msra.mxu0 0.0
  %1356 = vmatprep.subr.mxu0 0.0
  %1357 = vmatpush1.msra.mxu0 0.0
  %1358 = vmatprep.subr.mxu0 0.0
  %1359 = vmatpush1.msra.mxu0 0.0
  %1360 = vmatprep.subr.mxu0 0.0
  %1361 = vmatpush1.msra.mxu0 0.0
  %1362 = vmatprep.subr.mxu0 0.0
  %1363 = vmatpush1.msra.mxu0 0.0
  %1364 = vmatprep.subr.mxu0 0.0
  %1365 = vmatpush1.msra.mxu0 0.0
  %1366 = vmatprep.subr.mxu0 0.0
  %1367 = vmatpush1.msra.mxu0 0.0
  %1368 = vmatprep.subr.mxu0 0.0
  %1369 = vmatpush1.msra.mxu0 0.0
  %1370 = vmatprep.subr.mxu0 0.0
  %1371 = vmatpush1.msra.mxu0 0.0
  %1372 = vmatprep.subr.mxu0 0.0
  %1373 = vmatpush1.msra.mxu0 %v1340
  %1374 = vmatprep.subr.mxu0 0.0
  %1375 = vmatpush2.msra.mxu0 0.0
  %1376 = vmatprep.subr.mxu0 0.0
  %1377 = vmatpush2.msra.mxu0 0.0
  %1378 = vmatprep.subr.mxu0 0.0
  %1379 = vmatpush2.msra.mxu0 0.0
  %1380 = vmatprep.subr.mxu0 0.0
  %1381 = vmatpush2.msra.mxu0 0.0
  %1382 = vmatprep.subr.mxu0 0.0
  %1383 = vmatpush2.msra.mxu0 0.0
  %1384 = vmatprep.subr.mxu0 0.0
  %1385 = vmatpush2.msra.mxu0 0.0
  %1386 = vmatprep.subr.mxu0 0.0
  %1387 = vmatpush2.msra.mxu0 0.0
  %1388 = vmatprep.subr.mxu0 0.0
  %1389 = vmatpush2.msra.mxu0 0.0
  %1390 = vmatprep.subr.mxu0 0.0
  %1391 = vmatpush2.msra.mxu0 0.0
  %1392 = vmatprep.subr.mxu0 0.0
  %1393 = vmatpush2.msra.mxu0 0.0
  %1394 = vmatprep.subr.mxu0 0.0
  %1395 = vmatpush2.msra.mxu0 0.0
  %1396 = vmatprep.subr.mxu0 0.0
  %1397 = vmatpush2.msra.mxu0 0.0
  %1398 = vmatprep.subr.mxu0 0.0
  %1399 = vmatpush2.msra.mxu0 0.0
  %1400 = vmatprep.subr.mxu0 0.0
  %1401 = vmatpush2.msra.mxu0 0.0
  %1402 = vmatprep.subr.mxu0 0.0
  %1403 = vmatpush2.msra.mxu0 0.0
  %1404 = vmatprep.subr.mxu0 0.0
  %1405 = vmatpush2.msra.mxu0 0.0
  %1406 = vmatprep.mubr.f32.mxu0 0.0
  %1407 = vmatmul.mubr.f32.gmra.mxu0 %v1336
  %v1408 = vpop.f32.mrf.mxu0
  %v1409 = vadd.f32 %v1332, %v1408
  %v1410 = vpop.f32.mrf.mxu0
  %1411 = vdwg.mxu0
  %v1412 = vld [vmem:[%s11] sm:$0xff]
  %v1413 = vld [vmem:[%s11 + $0x8] sm:$0xff]
  %v1414 = vld [vmem:[%s11 + $0x10] sm:$0xff]
  %v1415 = vld [vmem:[%s11 + $0x18] sm:$0xff]
  %v1416 = vld [vmem:[%s11 + $0x20] sm:$0xff]
  %v1417 = vld [vmem:[%s11 + $0x28] sm:$0xff]
  %v1418 = vld [vmem:[%s11 + $0x30] sm:$0xff]
  %v1419 = vld [vmem:[%s11 + $0x38] sm:$0xff]
  %v1420 = vld [vmem:[%s11 + $0x40] sm:$0xff]
  %v1421 = vld [vmem:[%s11 + $0x48] sm:$0xff]
  %v1422 = vld [vmem:[%s11 + $0x50] sm:$0xff]
  %v1423 = vld [vmem:[%s11 + $0x58] sm:$0xff]
  %v1424 = vld [vmem:[%s11 + $0x60] sm:$0xff]
  %v1425 = vld [vmem:[%s11 + $0x68] sm:$0xff]
  %v1426 = vld [vmem:[%s11 + $0x70] sm:$0xff]
  %v1427 = vld [vmem:[%s11 + $0x78] sm:$0xff]
  %v1428 = vld [vmem:[%s11 + $0x80] sm:$0xff]
  %v1429 = vld [vmem:[%s11 + $0x88] sm:$0xff]
  %v1430 = vld [vmem:[%s11 + $0x90] sm:$0xff]
  %v1431 = vld [vmem:[%s11 + $0x98] sm:$0xff]
  %v1432 = vld [vmem:[%s11 + $0xa0] sm:$0xff]
  %v1433 = vld [vmem:[%s11 + $0xa8] sm:$0xff]
  %v1434 = vld [vmem:[%s11 + $0xb0] sm:$0xff]
  %v1435 = vld [vmem:[%s11 + $0xb8] sm:$0xff]
  %v1436 = vld [vmem:[%s11 + $0xc0] sm:$0xff]
  %v1437 = vld [vmem:[%s11 + $0xc8] sm:$0xff]
  %v1438 = vld [vmem:[%s11 + $0xd0] sm:$0xff]
  %v1439 = vld [vmem:[%s11 + $0xd8] sm:$0xff]
  %v1440 = vld [vmem:[%s11 + $0xe0] sm:$0xff]
  %v1441 = vld [vmem:[%s11 + $0xe8] sm:$0xff]
  %v1442 = vld [vmem:[%s11 + $0xf0] sm:$0xff]
  %v1443 = vld [vmem:[%s11 + $0xf8] sm:$0xff]
  %v1444 = vld [vmem:[%s12] sm:$0xff]
  %v1445 = vld [vmem:[%s12 + $0x8] sm:$0xff]
  %v1446 = vld [vmem:[%s12 + $0x10] sm:$0xff]
  %v1447 = vld [vmem:[%s12 + $0x18] sm:$0xff]
  %v1449 = vsel %vm69, %v1409, 0
  %1451 = vmatprep.subr.mxu0 0.0
  %1452 = vmatpush1.msra.mxu0 0.0
  %1453 = vmatprep.subr.mxu0 0.0
  %1454 = vmatpush1.msra.mxu0 0.0
  %1455 = vmatprep.subr.mxu0 0.0
  %1456 = vmatpush1.msra.mxu0 0.0
  %1457 = vmatprep.subr.mxu0 0.0
  %1458 = vmatpush1.msra.mxu0 0.0
  %1459 = vmatprep.subr.mxu0 0.0
  %1460 = vmatpush1.msra.mxu0 0.0
  %1461 = vmatprep.subr.mxu0 0.0
  %1462 = vmatpush1.msra.mxu0 0.0
  %1463 = vmatprep.subr.mxu0 0.0
  %1464 = vmatpush1.msra.mxu0 0.0
  %1465 = vmatprep.subr.mxu0 0.0
  %1466 = vmatpush1.msra.mxu0 0.0
  %1467 = vmatprep.subr.mxu0 0.0
  %1468 = vmatpush1.msra.mxu0 0.0
  %1469 = vmatprep.subr.mxu0 0.0
  %1470 = vmatpush1.msra.mxu0 0.0
  %1471 = vmatprep.subr.mxu0 0.0
  %1472 = vmatpush1.msra.mxu0 0.0
  %1473 = vmatprep.subr.mxu0 0.0
  %1474 = vmatpush1.msra.mxu0 0.0
  %1475 = vmatprep.subr.mxu0 0.0
  %1476 = vmatpush1.msra.mxu0 0.0
  %1477 = vmatprep.subr.mxu0 0.0
  %1478 = vmatpush1.msra.mxu0 0.0
  %1479 = vmatprep.subr.mxu0 %v1447
  %1480 = vmatpush1.msra.mxu0 %v1446
  %1481 = vmatprep.subr.mxu0 %v1445
  %1482 = vmatpush1.msra.mxu0 %v1444
  %1483 = vmatprep.subr.mxu0 0.0
  %1484 = vmatpush2.msra.mxu0 0.0
  %1485 = vmatprep.subr.mxu0 0.0
  %1486 = vmatpush2.msra.mxu0 0.0
  %1487 = vmatprep.subr.mxu0 0.0
  %1488 = vmatpush2.msra.mxu0 0.0
  %1489 = vmatprep.subr.mxu0 0.0
  %1490 = vmatpush2.msra.mxu0 0.0
  %1491 = vmatprep.subr.mxu0 0.0
  %1492 = vmatpush2.msra.mxu0 0.0
  %1493 = vmatprep.subr.mxu0 0.0
  %1494 = vmatpush2.msra.mxu0 0.0
  %1495 = vmatprep.subr.mxu0 0.0
  %1496 = vmatpush2.msra.mxu0 0.0
  %1497 = vmatprep.subr.mxu0 0.0
  %1498 = vmatpush2.msra.mxu0 0.0
  %1499 = vmatprep.subr.mxu0 0.0
  %1500 = vmatpush2.msra.mxu0 0.0
  %1501 = vmatprep.subr.mxu0 0.0
  %1502 = vmatpush2.msra.mxu0 0.0
  %1503 = vmatprep.subr.mxu0 0.0
  %1504 = vmatpush2.msra.mxu0 0.0
  %1505 = vmatprep.subr.mxu0 0.0
  %1506 = vmatpush2.msra.mxu0 0.0
  %1507 = vmatprep.subr.mxu0 0.0
  %1508 = vmatpush2.msra.mxu0 0.0
  %1509 = vmatprep.subr.mxu0 0.0
  %1510 = vmatpush2.msra.mxu0 0.0
  %1511 = vmatprep.subr.mxu0 0.0
  %1512 = vmatpush2.msra.mxu0 0.0
  %1513 = vmatprep.subr.mxu0 0.0
  %1514 = vmatpush2.msra.mxu0 0.0
  %1515 = vmatprep.mubr.f32.mxu0 0.0
  %1516 = vmatmul.mubr.f32.gmra.mxu0 %v1449
  %v1517 = vpop.f32.mrf.mxu0
  %v1518 = vadd.f32 0.0, %v1517
  %v1519 = vpop.f32.mrf.mxu0
  %v1520 = vadd.f32 0.0, %v1519
  %1521 = vdwg.mxu0
  %1522 = vmatprep.subr.mxu0 %v1443
  %1523 = vmatpush1.msra.mxu0 %v1442
  %1524 = vmatprep.subr.mxu0 %v1441
  %1525 = vmatpush1.msra.mxu0 %v1440
  %1526 = vmatprep.subr.mxu0 %v1439
  %1527 = vmatpush1.msra.mxu0 %v1438
  %1528 = vmatprep.subr.mxu0 %v1437
  %1529 = vmatpush1.msra.mxu0 %v1436
  %1530 = vmatprep.subr.mxu0 %v1435
  %1531 = vmatpush1.msra.mxu0 %v1434
  %1532 = vmatprep.subr.mxu0 %v1433
  %1533 = vmatpush1.msra.mxu0 %v1432
  %1534 = vmatprep.subr.mxu0 %v1431
  %1535 = vmatpush1.msra.mxu0 %v1430
  %1536 = vmatprep.subr.mxu0 %v1429
  %1537 = vmatpush1.msra.mxu0 %v1428
  %1538 = vmatprep.subr.mxu0 %v1427
  %1539 = vmatpush1.msra.mxu0 %v1426
  %1540 = vmatprep.subr.mxu0 %v1425
  %1541 = vmatpush1.msra.mxu0 %v1424
  %1542 = vmatprep.subr.mxu0 %v1423
  %1543 = vmatpush1.msra.mxu0 %v1422
  %1544 = vmatprep.subr.mxu0 %v1421
  %1545 = vmatpush1.msra.mxu0 %v1420
  %1546 = vmatprep.subr.mxu0 %v1419
  %1547 = vmatpush1.msra.mxu0 %v1418
  %1548 = vmatprep.subr.mxu0 %v1417
  %1549 = vmatpush1.msra.mxu0 %v1416
  %1550 = vmatprep.subr.mxu0 %v1415
  %1551 = vmatpush1.msra.mxu0 %v1414
  %1552 = vmatprep.subr.mxu0 %v1413
  %1553 = vmatpush1.msra.mxu0 %v1412
  %1554 = vmatprep.subr.mxu0 0.0
  %1555 = vmatpush2.msra.mxu0 0.0
  %1556 = vmatprep.subr.mxu0 0.0
  %1557 = vmatpush2.msra.mxu0 0.0
  %1558 = vmatprep.subr.mxu0 0.0
  %1559 = vmatpush2.msra.mxu0 0.0
  %1560 = vmatprep.subr.mxu0 0.0
  %1561 = vmatpush2.msra.mxu0 0.0
  %1562 = vmatprep.subr.mxu0 0.0
  %1563 = vmatpush2.msra.mxu0 0.0
  %1564 = vmatprep.subr.mxu0 0.0
  %1565 = vmatpush2.msra.mxu0 0.0
  %1566 = vmatprep.subr.mxu0 0.0
  %1567 = vmatpush2.msra.mxu0 0.0
  %1568 = vmatprep.subr.mxu0 0.0
  %1569 = vmatpush2.msra.mxu0 0.0
  %1570 = vmatprep.subr.mxu0 0.0
  %1571 = vmatpush2.msra.mxu0 0.0
  %1572 = vmatprep.subr.mxu0 0.0
  %1573 = vmatpush2.msra.mxu0 0.0
  %1574 = vmatprep.subr.mxu0 0.0
  %1575 = vmatpush2.msra.mxu0 0.0
  %1576 = vmatprep.subr.mxu0 0.0
  %1577 = vmatpush2.msra.mxu0 0.0
  %1578 = vmatprep.subr.mxu0 0.0
  %1579 = vmatpush2.msra.mxu0 0.0
  %1580 = vmatprep.subr.mxu0 0.0
  %1581 = vmatpush2.msra.mxu0 0.0
  %1582 = vmatprep.subr.mxu0 0.0
  %1583 = vmatpush2.msra.mxu0 0.0
  %1584 = vmatprep.subr.mxu0 0.0
  %1585 = vmatpush2.msra.mxu0 0.0
  %1586 = vmatprep.mubr.f32.mxu0 0.0
  %1587 = vmatmul.mubr.f32.gmra.mxu0 %v1324
  %v1588 = vpop.f32.mrf.mxu0
  %v1589 = vadd.f32 %v1518, %v1588
  %v1590 = vpop.f32.mrf.mxu0
  %v1591 = vadd.f32 %v1520, %v1590
  %1592 = vdwg.mxu0
  %v1593 = vld [vmem:[%s13] sm:$0x3]
  %v1595 = vlaneseq
  %v1596 = vshrl.u32 %v1595, 7
  %v1597 = vsub.s32 0, %v1596
  %v1598 = vrot.slane %v1593, %v1597
  %v1599 = vlaneseq
  %v1600 = vshrl.u32 %v1599, 7
  %v1601 = vsub.s32 1, %v1600
  %v1602 = vrot.slane %v1593, %v1601
  %v1605 = vadd.f32 %v1589, %v1598
  %v1606 = vadd.f32 %v1591, %v1602
  %v1607 = vmax.f32 %v1605, 0.0
  %v1608 = vmax.f32 %v1606, 0.0
  %v1609 = vld [vmem:[%s14] sm:$0xff]
  %v1610 = vld [vmem:[%s14 + $0x8] sm:$0xff]
  %v1611 = vld [vmem:[%s14 + $0x10] sm:$0xff]
  %v1612 = vld [vmem:[%s14 + $0x18] sm:$0xff]
  %v1613 = vld [vmem:[%s14 + $0x20] sm:$0xff]
  %v1614 = vld [vmem:[%s14 + $0x28] sm:$0xff]
  %v1615 = vld [vmem:[%s14 + $0x30] sm:$0xff]
  %v1616 = vld [vmem:[%s14 + $0x38] sm:$0xff]
  %v1617 = vld [vmem:[%s14 + $0x40] sm:$0xff]
  %v1618 = vld [vmem:[%s14 + $0x48] sm:$0xff]
  %v1619 = vld [vmem:[%s14 + $0x50] sm:$0xff]
  %v1620 = vld [vmem:[%s14 + $0x58] sm:$0xff]
  %v1621 = vld [vmem:[%s14 + $0x60] sm:$0xff]
  %v1622 = vld [vmem:[%s14 + $0x68] sm:$0xff]
  %v1623 = vld [vmem:[%s14 + $0x70] sm:$0xff]
  %v1624 = vld [vmem:[%s14 + $0x78] sm:$0xff]
  %v1625 = vld [vmem:[%s14 + $0x80] sm:$0xff]
  %v1626 = vld [vmem:[%s14 + $0x88] sm:$0xff]
  %v1627 = vld [vmem:[%s15] sm:$0x1]
  %v1629 = vlaneseq
  %v1630 = vshrl.u32 %v1629, 7
  %v1631 = vsub.s32 0, %v1630
  %v1632 = vrot.slane %v1627, %v1631
  %v1635 = vsel %vm69, %v1608, 0
  %1637 = vmatprep.subr.mxu0 0.0
  %1638 = vmatpush1.msra.mxu0 %v1624
  %1639 = vmatprep.subr.mxu0 0.0
  %1640 = vmatpush1.msra.mxu0 %v1623
  %1641 = vmatprep.subr.mxu0 0.0
  %1642 = vmatpush1.msra.mxu0 %v1622
  %1643 = vmatprep.subr.mxu0 0.0
  %1644 = vmatpush1.msra.mxu0 %v1621
  %1645 = vmatprep.subr.mxu0 0.0
  %1646 = vmatpush1.msra.mxu0 %v1620
  %1647 = vmatprep.subr.mxu0 0.0
  %1648 = vmatpush1.msra.mxu0 %v1619
  %1649 = vmatprep.subr.mxu0 0.0
  %1650 = vmatpush1.msra.mxu0 %v1618
  %1651 = vmatprep.subr.mxu0 0.0
  %1652 = vmatpush1.msra.mxu0 %v1617
  %1653 = vmatprep.subr.mxu0 0.0
  %1654 = vmatpush1.msra.mxu0 %v1616
  %1655 = vmatprep.subr.mxu0 0.0
  %1656 = vmatpush1.msra.mxu0 %v1615
  %1657 = vmatprep.subr.mxu0 0.0
  %1658 = vmatpush1.msra.mxu0 %v1614
  %1659 = vmatprep.subr.mxu0 0.0
  %1660 = vmatpush1.msra.mxu0 %v1613
  %1661 = vmatprep.subr.mxu0 0.0
  %1662 = vmatpush1.msra.mxu0 %v1612
  %1663 = vmatprep.subr.mxu0 0.0
  %1664 = vmatpush1.msra.mxu0 %v1611
  %1665 = vmatprep.subr.mxu0 0.0
  %1666 = vmatpush1.msra.mxu0 %v1610
  %1667 = vmatprep.subr.mxu0 0.0
  %1668 = vmatpush1.msra.mxu0 %v1609
  %1669 = vmatprep.subr.mxu0 0.0
  %1670 = vmatpush2.msra.mxu0 0.0
  %1671 = vmatprep.subr.mxu0 0.0
  %1672 = vmatpush2.msra.mxu0 0.0
  %1673 = vmatprep.subr.mxu0 0.0
  %1674 = vmatpush2.msra.mxu0 0.0
  %1675 = vmatprep.subr.mxu0 0.0
  %1676 = vmatpush2.msra.mxu0 0.0
  %1677 = vmatprep.subr.mxu0 0.0
  %1678 = vmatpush2.msra.mxu0 0.0
  %1679 = vmatprep.subr.mxu0 0.0
  %1680 = vmatpush2.msra.mxu0 0.0
  %1681 = vmatprep.subr.mxu0 0.0
  %1682 = vmatpush2.msra.mxu0 0.0
  %1683 = vmatprep.subr.mxu0 0.0
  %1684 = vmatpush2.msra.mxu0 0.0
  %1685 = vmatprep.subr.mxu0 0.0
  %1686 = vmatpush2.msra.mxu0 0.0
  %1687 = vmatprep.subr.mxu0 0.0
  %1688 = vmatpush2.msra.mxu0 0.0
  %1689 = vmatprep.subr.mxu0 0.0
  %1690 = vmatpush2.msra.mxu0 0.0
  %1691 = vmatprep.subr.mxu0 0.0
  %1692 = vmatpush2.msra.mxu0 0.0
  %1693 = vmatprep.subr.mxu0 0.0
  %1694 = vmatpush2.msra.mxu0 0.0
  %1695 = vmatprep.subr.mxu0 0.0
  %1696 = vmatpush2.msra.mxu0 0.0
  %1697 = vmatprep.subr.mxu0 0.0
  %1698 = vmatpush2.msra.mxu0 %v1626
  %1699 = vmatprep.subr.mxu0 0.0
  %1700 = vmatpush2.msra.mxu0 %v1625
  %1701 = vmatprep.mubr.f32.mxu0 %v1635
  %1702 = vmatmul.mubr.f32.gmra.mxu0 %v1607
  %v1703 = vpop.f32.mrf.mxu0
  %v1704 = vadd.f32 %v1632, %v1703
  %v1705 = vpop.f32.mrf.mxu0
  %1706 = vdwg.mxu0
  %vm1707 = vcmask 11264
  %1708 = vst.msk [vmem:[%s16] sm:$0xf] %vm1707, %v1704
  // Predicated region
  $region66: #{seft_forward.1} parent=0 // pred_check
    _
  $region67: #{seft_forward.1} parent=0 // pred_check_branch
    %1710 = sbr.rel (0) target = $region69
  $region68: #{seft_forward.1} parent=0 // pred_region
    _
  $region69: #{seft_forward.1} parent=0 // pred_fallthru
    _
  // Predicated region
  $region70: #{seft_forward.1} parent=0 // pred_check
    _
  $region71: #{seft_forward.1} parent=0 // pred_check_branch
    %1712 = sbr.rel (0) target = $region73
  $region72: #{seft_forward.1} parent=0 // pred_region
    _
  $region73: #{seft_forward.1} parent=0 // pred_fallthru
    _

</llo_original>
